<compile_context>
chip_gen: v7x
topology: tpu7x:2x2x1
jax: 0.10.0
libtpu: 0.0.40
codegen_flags: <defaults>
</compile_context>

<pallas_src>
import numpy as np
import jax
import jax.numpy as jnp
from jax import lax
from jax.experimental import pallas as pl
from jax.experimental.pallas import tpu as pltpu

HIDDEN = 512  # nn.Conv2d(num_features_out, 512, 3, padding=1)


def rpn_forward_kernel(x_ref, w1_ref, b1_ref, wh_ref, bh_ref, out_ref):
    # x_ref  : (1, TM, 9*Cin)  im2col rows (each row = flattened 3x3xCin patch)
    # w1_ref : (9*Cin, 512)    3x3 conv weight as a single matmul operand
    # b1_ref : (1, 512)
    # wh_ref : (512, Cpad)     fused 1x1 heads [objectness | transformer | 0-pad]
    # bh_ref : (1, Cpad)
    # out_ref: (1, TM, Cpad)   lane-dense combined head output
    x = x_ref[0]                                                    # (TM, 9*Cin)

    # 3x3 conv (as one matmul) + bias + ReLU
    feat = jnp.dot(x, w1_ref[...], preferred_element_type=jnp.float32)
    feat = jnp.maximum(feat + b1_ref[...], 0.0)                     # (TM, 512)

    # Both 1x1 heads in a single lane-dense matmul.
    out = jnp.dot(feat, wh_ref[...], preferred_element_type=jnp.float32)
    out = out + bh_ref[...]

    out_ref[...] = out[None]


def rpn_forward(x_nchw, w1, b1, wo, bo, wt, bt, *, tile_m=512):
    """Pallas equivalent of RegionProposalNetwork.forward.

    x_nchw: (N, Cin, H, W) float32 (PyTorch layout)
    w1    : (9, Cin, 512)  3x3 conv weight, tap-major (dy*3+dx)
    b1    : (1, 512)
    wo/bo : (512, 2A)/(1, 2A)   objectness 1x1 conv
    wt/bt : (512, 4A)/(1, 4A)   transformer 1x1 conv
    returns (objectnesses (N*H*W*A, 2), transformers (N*H*W*A, 4))
    """
    x = jnp.transpose(x_nchw, (0, 2, 3, 1))            # NCHW -> NHWC
    N, H, W, Cin = x.shape
    A2 = wo.shape[1]
    A4 = wt.shape[1]
    K9 = 9 * Cin
    M = H * W

    # --- im2col: (N, H*W, 9*Cin), column index = tap*Cin + cin --------------
    xp = jnp.pad(x, ((0, 0), (1, 1), (1, 1), (0, 0)))  # padding=1 for 3x3 conv
    taps = [xp[:, dy:dy + H, dx:dx + W, :] for dy in range(3) for dx in range(3)]
    cols = jnp.concatenate(taps, axis=-1).reshape(N, M, K9)

    # --- spatial row-strip tiling of the M (= H*W) dimension ----------------
    TM = min(tile_m, M)
    TM = max(8, (TM // 8) * 8)                         # sublane-aligned strip
    Mp = ((M + TM - 1) // TM) * TM
    if Mp != M:
        cols = jnp.pad(cols, ((0, 0), (0, Mp - M), (0, 0)))

    # --- fused + lane-padded head weights/biases -----------------------------
    Cout = A2 + A4
    Cpad = ((Cout + 127) // 128) * 128                 # unmasked 128-wide stores
    wh = jnp.pad(jnp.concatenate([wo, wt], axis=1), ((0, 0), (0, Cpad - Cout)))
    bh = jnp.pad(jnp.concatenate([bo, bt], axis=1), ((0, 0), (0, Cpad - Cout)))

    w1m = w1.reshape(K9, HIDDEN)                       # single matmul operand

    grid = (N, Mp // TM)
    out = pl.pallas_call(
        rpn_forward_kernel,
        out_shape=jax.ShapeDtypeStruct((N, Mp, Cpad), jnp.float32),
        grid_spec=pltpu.PrefetchScalarGridSpec(
            num_scalar_prefetch=0,
            grid=grid,
            in_specs=[
                pl.BlockSpec((1, TM, K9), lambda n, m: (n, m, 0)),
                pl.BlockSpec((K9, HIDDEN), lambda n, m: (0, 0)),
                pl.BlockSpec((1, HIDDEN), lambda n, m: (0, 0)),
                pl.BlockSpec((HIDDEN, Cpad), lambda n, m: (0, 0)),
                pl.BlockSpec((1, Cpad), lambda n, m: (0, 0)),
            ],
            out_specs=pl.BlockSpec((1, TM, Cpad), lambda n, m: (n, m, 0)),
        ),
        compiler_params=pltpu.CompilerParams(
            dimension_semantics=("parallel", "parallel")),
    )(cols, w1m, b1, wh, bh)

    # Strip M padding + lane padding, then split the fused head.
    out = out[:, :M, :Cout]                            # (N, H*W, 2A+4A)
    # torch: permute(0,2,3,1).contiguous().view(-1, 2/4) — we are already NHWC
    obj = out[..., :A2].reshape(-1, 2)
    trn = out[..., A2:].reshape(-1, 4)
    return obj, trn


def _reference(x_nchw, w1, b1, wo, bo, wt, bt):
    """Pure-JAX reference (NHWC conv) for correctness checking."""
    x = jnp.transpose(x_nchw, (0, 2, 3, 1))
    N, H, W, Cin = x.shape
    w1_hwio = w1.reshape(3, 3, Cin, HIDDEN)
    feat = lax.conv_general_dilated(
        x, w1_hwio, window_strides=(1, 1), padding="SAME",
        dimension_numbers=("NHWC", "HWIO", "NHWC"))
    feat = jnp.maximum(feat + b1.reshape(1, 1, 1, -1), 0.0)
    obj = jnp.einsum("nhwc,co->nhwo", feat, wo) + bo.reshape(1, 1, 1, -1)
    trn = jnp.einsum("nhwc,co->nhwo", feat, wt) + bt.reshape(1, 1, 1, -1)
    return obj.reshape(-1, 2), trn.reshape(-1, 4)


if __name__ == "__main__":
    # Small, deterministic config consistent with the module's __init__.
    num_features_out = 4
    anchor_ratios = [(1, 2), (1, 1), (2, 1)]
    anchor_sizes = [128, 256, 512]
    num_anchors = len(anchor_ratios) * len(anchor_sizes)   # 9
    N, H, W = 2, 16, 16

    key = jax.random.PRNGKey(0)
    kx, k1, k2, k3, k4, k5, k6 = jax.random.split(key, 7)

    x = jax.random.normal(kx, (N, num_features_out, H, W), jnp.float32)

    # Deterministic parameter init (synthetic; not a checkpoint load).
    w1 = 0.05 * jax.random.normal(k1, (9, num_features_out, HIDDEN), jnp.float32)
    b1 = 0.01 * jax.random.normal(k2, (1, HIDDEN), jnp.float32)
    wo = 0.05 * jax.random.normal(k3, (HIDDEN, num_anchors * 2), jnp.float32)
    bo = 0.01 * jax.random.normal(k4, (1, num_anchors * 2), jnp.float32)
    wt = 0.05 * jax.random.normal(k5, (HIDDEN, num_anchors * 4), jnp.float32)
    bt = 0.01 * jax.random.normal(k6, (1, num_anchors * 4), jnp.float32)

    obj, trn = jax.jit(rpn_forward)(x, w1, b1, wo, bo, wt, bt)
    jax.block_until_ready((obj, trn))

    obj_ref, trn_ref = _reference(x, w1, b1, wo, bo, wt, bt)
    assert obj.shape == (N * H * W * num_anchors, 2), obj.shape
    assert trn.shape == (N * H * W * num_anchors, 4), trn.shape
    np.testing.assert_allclose(np.asarray(obj), np.asarray(obj_ref),
                               rtol=1e-4, atol=1e-4)
    np.testing.assert_allclose(np.asarray(trn), np.asarray(trn_ref),
                               rtol=1e-4, atol=1e-4)

    # TODO(synk): sample/loss/generate_anchors/generate_proposals (NMS, random
    # sampling) are host-side training/inference glue with data-dependent
    # shapes and are not part of forward(); not implemented as kernels.
    print("KERNEL_OK")
</pallas_src>

<mosaic_0001>
module attributes {stable_mosaic.version = 11 : i64} {
  func.func @rpn_forward_kernel(%arg0: i32, %arg1: i32, %arg2: memref<1x256x36xf32, #tpu.memory_space<vmem>>, %arg3: memref<36x512xf32, #tpu.memory_space<vmem>>, %arg4: memref<1x512xf32, #tpu.memory_space<vmem>>, %arg5: memref<512x128xf32, #tpu.memory_space<vmem>>, %arg6: memref<1x128xf32, #tpu.memory_space<vmem>>, %arg7: memref<1x256x128xf32, #tpu.memory_space<vmem>>) attributes {dimension_semantics = [#tpu.dimension_semantics<parallel>, #tpu.dimension_semantics<parallel>], iteration_bounds = array<i64: 2, 1>, scalar_prefetch = 0 : i64, scratch_operands = 0 : i64, tpu.core_type = #tpu.core_type<tc>, window_params = [{transform_indices = @transform_0, window_bounds = array<i64: 1, 256, 36>}, {pipeline_mode = #tpu.pipeline_mode<synchronous>, transform_indices = @transform_1, window_bounds = array<i64: 36, 512>}, {pipeline_mode = #tpu.pipeline_mode<synchronous>, transform_indices = @transform_2, window_bounds = array<i64: 1, 512>}, {pipeline_mode = #tpu.pipeline_mode<synchronous>, transform_indices = @transform_3, window_bounds = array<i64: 512, 128>}, {pipeline_mode = #tpu.pipeline_mode<synchronous>, transform_indices = @transform_4, window_bounds = array<i64: 1, 128>}, {transform_indices = @transform_5, window_bounds = array<i64: 1, 256, 128>}]} {
    %c0 = arith.constant 0 : index
    %c0_0 = arith.constant 0 : index
    %c0_1 = arith.constant 0 : index
    %0 = vector.load %arg2[%c0, %c0_0, %c0_1] : memref<1x256x36xf32, #tpu.memory_space<vmem>>, vector<1x256x36xf32>
    %1 = vector.shape_cast %0 : vector<1x256x36xf32> to vector<256x36xf32>
    %c0_2 = arith.constant 0 : index
    %c0_3 = arith.constant 0 : index
    %2 = vector.load %arg3[%c0_2, %c0_3] : memref<36x512xf32, #tpu.memory_space<vmem>>, vector<36x512xf32>
    %cst = arith.constant dense<0.000000e+00> : vector<256x512xf32>
    %3 = tpu.matmul %1, %2, %cst {dimension_numbers = #tpu.dot_dimension_numbers<[1], [0], [0], [1], [0, 0, 1, 1], [], []>} : vector<256x36xf32>, vector<36x512xf32>, vector<256x512xf32> -> vector<256x512xf32>
    %c0_4 = arith.constant 0 : index
    %c0_5 = arith.constant 0 : index
    %4 = vector.load %arg4[%c0_4, %c0_5] : memref<1x512xf32, #tpu.memory_space<vmem>>, vector<1x512xf32>
    %5 = vector.broadcast %4 : vector<1x512xf32> to vector<256x512xf32>
    %6 = arith.addf %3, %5 : vector<256x512xf32>
    %cst_6 = arith.constant 0.000000e+00 : f32
    %7 = vector.broadcast %cst_6 : f32 to vector<256x512xf32>
    %8 = arith.maximumf %6, %7 : vector<256x512xf32>
    %c0_7 = arith.constant 0 : index
    %c0_8 = arith.constant 0 : index
    %9 = vector.load %arg5[%c0_7, %c0_8] : memref<512x128xf32, #tpu.memory_space<vmem>>, vector<512x128xf32>
    %cst_9 = arith.constant dense<0.000000e+00> : vector<256x128xf32>
    %10 = tpu.matmul %8, %9, %cst_9 {dimension_numbers = #tpu.dot_dimension_numbers<[1], [0], [0], [1], [0, 0, 1, 1], [], []>} : vector<256x512xf32>, vector<512x128xf32>, vector<256x128xf32> -> vector<256x128xf32>
    %c0_10 = arith.constant 0 : index
    %c0_11 = arith.constant 0 : index
    %11 = vector.load %arg6[%c0_10, %c0_11] : memref<1x128xf32, #tpu.memory_space<vmem>>, vector<1x128xf32>
    %12 = vector.broadcast %11 : vector<1x128xf32> to vector<256x128xf32>
    %13 = arith.addf %10, %12 : vector<256x128xf32>
    %14 = vector.shape_cast %13 : vector<256x128xf32> to vector<1x256x128xf32>
    %c0_12 = arith.constant 0 : index
    %c0_13 = arith.constant 0 : index
    %c0_14 = arith.constant 0 : index
    %15 = vector.load %arg7[%c0_12, %c0_13, %c0_14] : memref<1x256x128xf32, #tpu.memory_space<vmem>>, vector<1x256x128xf32>
    tpu.vector_store %arg7[%c0_12, %c0_13, %c0_14], %14 {strides = array<i32>} : memref<1x256x128xf32, #tpu.memory_space<vmem>>, vector<1x256x128xf32>,
    return
  }
  func.func @transform_0(%arg0: i32, %arg1: i32) -> (i32, i32, i32) {
    %c0_i32 = arith.constant 0 : i32
    %c0_i32_0 = arith.constant 0 : i32
    return %arg0, %arg1, %c0_i32 : i32, i32, i32
  }
  func.func @transform_1(%arg0: i32, %arg1: i32) -> (i32, i32) {
    %c0_i32 = arith.constant 0 : i32
    %c0_i32_0 = arith.constant 0 : i32
    %c0_i32_1 = arith.constant 0 : i32
    return %c0_i32, %c0_i32_0 : i32, i32
  }
  func.func @transform_2(%arg0: i32, %arg1: i32) -> (i32, i32) {
    %c0_i32 = arith.constant 0 : i32
    %c0_i32_0 = arith.constant 0 : i32
    %c0_i32_1 = arith.constant 0 : i32
    return %c0_i32, %c0_i32_0 : i32, i32
  }
  func.func @transform_3(%arg0: i32, %arg1: i32) -> (i32, i32) {
    %c0_i32 = arith.constant 0 : i32
    %c0_i32_0 = arith.constant 0 : i32
    %c0_i32_1 = arith.constant 0 : i32
    return %c0_i32, %c0_i32_0 : i32, i32
  }
  func.func @transform_4(%arg0: i32, %arg1: i32) -> (i32, i32) {
    %c0_i32 = arith.constant 0 : i32
    %c0_i32_0 = arith.constant 0 : i32
    %c0_i32_1 = arith.constant 0 : i32
    return %c0_i32, %c0_i32_0 : i32, i32
  }
  func.func @transform_5(%arg0: i32, %arg1: i32) -> (i32, i32, i32) {
    %c0_i32 = arith.constant 0 : i32
    %c0_i32_0 = arith.constant 0 : i32
    return %arg0, %arg1, %c0_i32 : i32, i32, i32
  }
}

</mosaic_0001>

<llo_original>
// kernel: rpn_forward.1
$region0: #{rpn_forward.1}
  #allocation0 [shape = 'u32[]', space=smem, size = 0x4, offset = 0x4, fixed_abs, tag = 'smem constant byte address 0x4 - core index']
  #allocation1 [shape = 'u32[144,128]{1,0:T(1,128)}', space=vmem, size = 0x12000, scoped, tag = 'internal scratch']
  %s0 = inlined_call_operand.vmem [shape: f32[2,256,36], index: 0, kind: input, shape index: {}]
  %s1 = inlined_call_operand.vmem [shape: f32[36,512], index: 1, kind: input, shape index: {}]
  %s2 = inlined_call_operand.vmem [shape: f32[1,512], index: 2, kind: input, shape index: {}]
  %s3 = inlined_call_operand.vmem [shape: f32[512,128], index: 3, kind: input, shape index: {}]
  %s4 = inlined_call_operand.vmem [shape: f32[1,128], index: 4, kind: input, shape index: {}]
  %s5 = inlined_call_operand.vmem [shape: f32[2,256,128], index: 5, kind: output, shape index: {}]
  %s6 = sld [smem:[#allocation0]]
  $region53: #{rpn_forward.1} parent=0
    _
  %s8 = ssub.s32 1, %s6
  %s9 = scalar_select 0, %s8, %s6
  loop: start=0, step=1, limit=4
  $region2: #{rpn_forward.1} parent=0 // loop_pre_header
    _
  $region3: #{rpn_forward.1} parent=0 // loop_header
    %s11 = sphi 0, %s15
    %p12 = scmp.ge.s32.totalorder %s11, 4
    %s18 = sphi 0, %s30
    %s19 = sphi 0, %s26
    %s20 = sphi 0, %s18
    %s21 = sphi 0, %s19
    %s22 = sphi 0, %s20
    %s23 = sphi 0, %s21
    %s35 = sphi 0, %s37
    %s38 = sphi 0, %s35
    %s39 = sphi 0, %s38
    %s55 = sphi 0, %s39
    %s59 = sphi 0, %s59
    %s61 = sphi 0, %s59
    %s62 = sphi 0, %s61
    %s76 = sphi 0, %s62
    %s80 = sphi 0, %s80
    %s82 = sphi 0, %s80
    %s83 = sphi 0, %s82
    %s97 = sphi 0, %s83
    %s101 = sphi 0, %s101
    %s103 = sphi 0, %s101
    %s104 = sphi 0, %s103
    %s118 = sphi 0, %s104
    %s122 = sphi 0, %s122
    %s124 = sphi 0, %s122
    %s125 = sphi 0, %s124
    %s139 = sphi 0, %s125
    %s147 = sphi 0, %s149
    %s150 = sphi 0, %s147
    %s151 = sphi 0, %s150
    %s167 = sphi 0, %s151
  $region4: #{rpn_forward.1} parent=0 // loop_header_branch
    %14 = sbr.rel (%p12) target = $region8
  $region5: #{rpn_forward.1} parent=0 // loop_body
    %s16 = ssub.s32 %s11, 1
    %s17 = ssub.s32 %s11, 2
    %s24 = sadd.s32 1, %s19
    %p25 = scmp.ge.s32.totalorder %s24, 1
    %s26 = scalar_select %p25, 0, %s24
    %s27 = sadd.s32 1, %s18
    %s28 = scalar_select %p25, %s27, %s18
    %p29 = scmp.ge.s32.totalorder %s28, 2
    %s30 = scalar_select %p29, 0, %s28
    %s31 = ssub.s32 %s18, %s30
    %s32 = ssub.s32 %s19, %s26
    %s33 = sor.u32 %s31, %s32
    %p34 = scmp.eq.s32.totalorder %s33, 0
    %s36 = sadd.s32 %s35, 1
    %s37 = scalar_select %p34, %s35, %s36
    %p40 = pneg %p34
    %p41 = scmp.eq.s32.totalorder %s11, 1
    %p42 = por %p40, %p41
    %p43 = scmp.ne.s32.totalorder %s35, %s38
    %p44 = scmp.eq.s32.totalorder %s11, 0
    %p45 = por %p43, %p44
    %p46 = scmp.ne.s32.totalorder %s35, %s38
    %p47 = scmp.eq.s32.totalorder %s16, 1
    %p48 = por %p46, %p47
    %p49 = scmp.ne.s32.totalorder %s38, %s39
    %p50 = scmp.eq.s32.totalorder %s16, 0
    %p51 = por %p49, %p50
    %p52 = scmp.ne.s32.totalorder %s38, %s39
    %p53 = scmp.eq.s32.totalorder %s17, 1
    %p54 = por %p52, %p53
    %p56 = scmp.ne.s32.totalorder %s39, %s55
    %p57 = scmp.eq.s32.totalorder %s17, 0
    %p58 = por %p56, %p57
    %s60 = sadd.s32 %s59, 1
    %p63 = scmp.eq.s32.totalorder %s11, 1
    %p64 = scmp.ne.s32.totalorder %s59, %s61
    %p65 = scmp.eq.s32.totalorder %s11, 0
    %p66 = por %p64, %p65
    %p67 = scmp.ne.s32.totalorder %s59, %s61
    %p68 = scmp.eq.s32.totalorder %s16, 1
    %p69 = por %p67, %p68
    %p70 = scmp.ne.s32.totalorder %s61, %s62
    %p71 = scmp.eq.s32.totalorder %s16, 0
    %p72 = por %p70, %p71
    %p73 = scmp.ne.s32.totalorder %s61, %s62
    %p74 = scmp.eq.s32.totalorder %s17, 1
    %p75 = por %p73, %p74
    %p77 = scmp.ne.s32.totalorder %s62, %s76
    %p78 = scmp.eq.s32.totalorder %s17, 0
    %p79 = por %p77, %p78
    %s81 = sadd.s32 %s80, 1
    %p84 = scmp.eq.s32.totalorder %s11, 1
    %p85 = scmp.ne.s32.totalorder %s80, %s82
    %p86 = scmp.eq.s32.totalorder %s11, 0
    %p87 = por %p85, %p86
    %p88 = scmp.ne.s32.totalorder %s80, %s82
    %p89 = scmp.eq.s32.totalorder %s16, 1
    %p90 = por %p88, %p89
    %p91 = scmp.ne.s32.totalorder %s82, %s83
    %p92 = scmp.eq.s32.totalorder %s16, 0
    %p93 = por %p91, %p92
    %p94 = scmp.ne.s32.totalorder %s82, %s83
    %p95 = scmp.eq.s32.totalorder %s17, 1
    %p96 = por %p94, %p95
    %p98 = scmp.ne.s32.totalorder %s83, %s97
    %p99 = scmp.eq.s32.totalorder %s17, 0
    %p100 = por %p98, %p99
    %s102 = sadd.s32 %s101, 1
    %p105 = scmp.eq.s32.totalorder %s11, 1
    %p106 = scmp.ne.s32.totalorder %s101, %s103
    %p107 = scmp.eq.s32.totalorder %s11, 0
    %p108 = por %p106, %p107
    %p109 = scmp.ne.s32.totalorder %s101, %s103
    %p110 = scmp.eq.s32.totalorder %s16, 1
    %p111 = por %p109, %p110
    %p112 = scmp.ne.s32.totalorder %s103, %s104
    %p113 = scmp.eq.s32.totalorder %s16, 0
    %p114 = por %p112, %p113
    %p115 = scmp.ne.s32.totalorder %s103, %s104
    %p116 = scmp.eq.s32.totalorder %s17, 1
    %p117 = por %p115, %p116
    %p119 = scmp.ne.s32.totalorder %s104, %s118
    %p120 = scmp.eq.s32.totalorder %s17, 0
    %p121 = por %p119, %p120
    %s123 = sadd.s32 %s122, 1
    %p126 = scmp.eq.s32.totalorder %s11, 1
    %p127 = scmp.ne.s32.totalorder %s122, %s124
    %p128 = scmp.eq.s32.totalorder %s11, 0
    %p129 = por %p127, %p128
    %p130 = scmp.ne.s32.totalorder %s122, %s124
    %p131 = scmp.eq.s32.totalorder %s16, 1
    %p132 = por %p130, %p131
    %p133 = scmp.ne.s32.totalorder %s124, %s125
    %p134 = scmp.eq.s32.totalorder %s16, 0
    %p135 = por %p133, %p134
    %p136 = scmp.ne.s32.totalorder %s124, %s125
    %p137 = scmp.eq.s32.totalorder %s17, 1
    %p138 = por %p136, %p137
    %p140 = scmp.ne.s32.totalorder %s125, %s139
    %p141 = scmp.eq.s32.totalorder %s17, 0
    %p142 = por %p140, %p141
    %s143 = ssub.s32 %s18, %s30
    %s144 = ssub.s32 %s19, %s26
    %s145 = sor.u32 %s143, %s144
    %p146 = scmp.eq.s32.totalorder %s145, 0
    %s148 = sadd.s32 %s147, 1
    %s149 = scalar_select %p146, %s147, %s148
    %p152 = pneg %p146
    %p153 = scmp.eq.s32.totalorder %s11, 1
    %p154 = por %p152, %p153
    %p155 = scmp.ne.s32.totalorder %s147, %s150
    %p156 = scmp.eq.s32.totalorder %s11, 0
    %p157 = por %p155, %p156
    %p158 = scmp.ne.s32.totalorder %s147, %s150
    %p159 = scmp.eq.s32.totalorder %s16, 1
    %p160 = por %p158, %p159
    %p161 = scmp.ne.s32.totalorder %s150, %s151
    %p162 = scmp.eq.s32.totalorder %s16, 0
    %p163 = por %p161, %p162
    %p164 = scmp.ne.s32.totalorder %s150, %s151
    %p165 = scmp.eq.s32.totalorder %s17, 1
    %p166 = por %p164, %p165
    %p168 = scmp.ne.s32.totalorder %s151, %s167
    %p169 = scmp.eq.s32.totalorder %s17, 0
    %p170 = por %p168, %p169
    %p171 = scmp.le.s32.totalorder 1, %s11
    %p172 = scmp.lt.s32.totalorder %s11, 3
    %p173 = pnand %p171, %p172
    %p174 = pneg %p173
    // Predicated region
    $region9: #{rpn_forward.1} parent=5 // pred_check
      _
    $region10: #{rpn_forward.1} parent=5 // pred_check_branch
      %176 = sbr.rel (%p173) target = $region12
    $region11: #{rpn_forward.1} parent=5 // pred_region
      %s177 = ssub.s32 %s11, 1
      // Predicated region
      $region13: #{rpn_forward.1} parent=11 // pred_check
        %p178 = pneg %p72
      $region14: #{rpn_forward.1} parent=11 // pred_check_branch
        %180 = sbr.rel (%p178) target = $region16
      $region15: #{rpn_forward.1} parent=11 // pred_region
        _
      $region16: #{rpn_forward.1} parent=11 // pred_fallthru
        _
      // Predicated region
      $region17: #{rpn_forward.1} parent=11 // pred_check
        %p181 = pneg %p93
      $region18: #{rpn_forward.1} parent=11 // pred_check_branch
        %183 = sbr.rel (%p181) target = $region20
      $region19: #{rpn_forward.1} parent=11 // pred_region
        _
      $region20: #{rpn_forward.1} parent=11 // pred_fallthru
        _
      // Predicated region
      $region21: #{rpn_forward.1} parent=11 // pred_check
        %p184 = pneg %p114
      $region22: #{rpn_forward.1} parent=11 // pred_check_branch
        %186 = sbr.rel (%p184) target = $region24
      $region23: #{rpn_forward.1} parent=11 // pred_region
        _
      $region24: #{rpn_forward.1} parent=11 // pred_fallthru
        _
      // Predicated region
      $region25: #{rpn_forward.1} parent=11 // pred_check
        %p187 = pneg %p135
      $region26: #{rpn_forward.1} parent=11 // pred_check_branch
        %189 = sbr.rel (%p187) target = $region28
      $region27: #{rpn_forward.1} parent=11 // pred_region
        _
      $region28: #{rpn_forward.1} parent=11 // pred_fallthru
        _
    $region12: #{rpn_forward.1} parent=5 // pred_fallthru
      _
    %p190 = scmp.lt.s32.totalorder %s11, 2
    // Predicated region
    $region29: #{rpn_forward.1} parent=5 // pred_check
      %p191 = pneg %p190
    $region30: #{rpn_forward.1} parent=5 // pred_check_branch
      %193 = sbr.rel (%p191) target = $region32
    $region31: #{rpn_forward.1} parent=5 // pred_region
      // Predicated region
      $region33: #{rpn_forward.1} parent=31 // pred_check
        %p194 = pneg %p45
      $region34: #{rpn_forward.1} parent=31 // pred_check_branch
        %196 = sbr.rel (%p194) target = $region36
      $region35: #{rpn_forward.1} parent=31 // pred_region
        %s197 = smul.u32 32, %s19
        %p198 = scmp.lt.s32.totalorder %s18, 1
        %s199 = scalar_select %p198, %s18, 1
        %p200 = scmp.lt.s32.totalorder %s197, 31
        %s201 = scalar_select %p200, %s197, 31
        %s202 = smul.addr %s199, 32
        %s203 = sadd.s32 %s201, %s202
        %s204 = smul.addr %s203, 8
        %s205 = scalar_lea.vmem %s0, %s204
        %s206 = smul.u32 32, %s19
      $region36: #{rpn_forward.1} parent=31 // pred_fallthru
        _
    $region32: #{rpn_forward.1} parent=5 // pred_fallthru
      _
    %p207 = scmp.le.s32.totalorder 1, %s11
    %p208 = scmp.lt.s32.totalorder %s11, 3
    %p209 = pnand %p207, %p208
    %p210 = pneg %p209
    // Predicated region
    $region37: #{rpn_forward.1} parent=5 // pred_check
      _
    $region38: #{rpn_forward.1} parent=5 // pred_check_branch
      %212 = sbr.rel (%p209) target = $region40
    $region39: #{rpn_forward.1} parent=5 // pred_region
      %s213 = ssub.s32 %s11, 1
      %s214 = smul.u32 32, %s21
      %p215 = scmp.lt.s32.totalorder %s20, 1
      %s216 = scalar_select %p215, %s20, 1
      %p217 = scmp.lt.s32.totalorder %s214, 31
      %s218 = scalar_select %p217, %s214, 31
      %s219 = smul.addr %s216, 32
      %s220 = sadd.s32 %s218, %s219
      %s221 = smul.addr %s220, 8
      %s222 = scalar_lea.vmem %s0, %s221
      %p223 = pneg %p51
      %p224 = pneg %p48
      %p225 = pneg %p72
      %p226 = pneg %p69
      %p227 = pneg %p93
      %p228 = pneg %p90
      %p229 = pneg %p114
      %p230 = pneg %p111
      %p231 = pneg %p135
      %p232 = pneg %p132
      %p233 = pneg %p163
      %p234 = pneg %p160
      %s235 = smul.u32 32, %s21
      %p236 = scmp.lt.s32.totalorder %s20, 1
      %s237 = scalar_select %p236, %s20, 1
      %p238 = scmp.lt.s32.totalorder %s235, 31
      %s239 = scalar_select %p238, %s235, 31
      %s240 = smul.addr %s237, 32
      %s241 = sadd.s32 %s239, %s240
      %s242 = smul.addr %s241, 8
      %s243 = scalar_lea.vmem %s5, %s242
      %s244 = smul.u32 32, %s21
      %p245 = scmp.lt.s32.totalorder %s20, 1
      %s246 = scalar_select %p245, %s20, 1
      %p247 = scmp.lt.s32.totalorder %s244, 31
      %s248 = scalar_select %p247, %s244, 31
      %s249 = smul.addr %s246, 32
      %s250 = sadd.s32 %s248, %s249
      %s251 = smul.addr %s250, 8
      %s252 = scalar_lea.vmem %s0, %s251
      %s253 = smul.u32 32, %s21
      %s254 = smul.u32 32, %s21
      %p255 = scmp.lt.s32.totalorder %s20, 1
      %s256 = scalar_select %p255, %s20, 1
      %p257 = scmp.lt.s32.totalorder %s254, 31
      %s258 = scalar_select %p257, %s254, 31
      %s259 = smul.addr %s256, 32
      %s260 = sadd.s32 %s258, %s259
      %s261 = smul.addr %s260, 8
      %s262 = scalar_lea.vmem %s5, %s261
      %s263 = smul.u32 32, %s21
      %v264 = vld [vmem:[%s252] sm:$0xff]
      %v265 = vld [vmem:[%s252 + $0x8] sm:$0xff]
      %v266 = vld [vmem:[%s252 + $0x10] sm:$0xff]
      %v267 = vld [vmem:[%s252 + $0x18] sm:$0xff]
      %v268 = vld [vmem:[%s252 + $0x20] sm:$0xff]
      %v269 = vld [vmem:[%s252 + $0x28] sm:$0xff]
      %v270 = vld [vmem:[%s252 + $0x30] sm:$0xff]
      %v271 = vld [vmem:[%s252 + $0x38] sm:$0xff]
      %v272 = vld [vmem:[%s252 + $0x40] sm:$0xff]
      %v273 = vld [vmem:[%s252 + $0x48] sm:$0xff]
      %v274 = vld [vmem:[%s252 + $0x50] sm:$0xff]
      %v275 = vld [vmem:[%s252 + $0x58] sm:$0xff]
      %v276 = vld [vmem:[%s252 + $0x60] sm:$0xff]
      %v277 = vld [vmem:[%s252 + $0x68] sm:$0xff]
      %v278 = vld [vmem:[%s252 + $0x70] sm:$0xff]
      %v279 = vld [vmem:[%s252 + $0x78] sm:$0xff]
      %v280 = vld [vmem:[%s252 + $0x80] sm:$0xff]
      %v281 = vld [vmem:[%s252 + $0x88] sm:$0xff]
      %v282 = vld [vmem:[%s252 + $0x90] sm:$0xff]
      %v283 = vld [vmem:[%s252 + $0x98] sm:$0xff]
      %v284 = vld [vmem:[%s252 + $0xa0] sm:$0xff]
      %v285 = vld [vmem:[%s252 + $0xa8] sm:$0xff]
      %v286 = vld [vmem:[%s252 + $0xb0] sm:$0xff]
      %v287 = vld [vmem:[%s252 + $0xb8] sm:$0xff]
      %v288 = vld [vmem:[%s252 + $0xc0] sm:$0xff]
      %v289 = vld [vmem:[%s252 + $0xc8] sm:$0xff]
      %v290 = vld [vmem:[%s252 + $0xd0] sm:$0xff]
      %v291 = vld [vmem:[%s252 + $0xd8] sm:$0xff]
      %v292 = vld [vmem:[%s252 + $0xe0] sm:$0xff]
      %v293 = vld [vmem:[%s252 + $0xe8] sm:$0xff]
      %v294 = vld [vmem:[%s252 + $0xf0] sm:$0xff]
      %v295 = vld [vmem:[%s252 + $0xf8] sm:$0xff]
      %v296 = vld [vmem:[%s1] sm:$0xff]
      %v297 = vld [vmem:[%s1 + $0x8] sm:$0xff]
      %v298 = vld [vmem:[%s1 + $0x10] sm:$0xff]
      %v299 = vld [vmem:[%s1 + $0x18] sm:$0xff]
      %v300 = vld [vmem:[%s1 + $0x20] sm:$0xff]
      %v301 = vld [vmem:[%s1 + $0x28] sm:$0xff]
      %v302 = vld [vmem:[%s1 + $0x30] sm:$0xff]
      %v303 = vld [vmem:[%s1 + $0x38] sm:$0xff]
      %v304 = vld [vmem:[%s1 + $0x40] sm:$0xff]
      %v305 = vld [vmem:[%s1 + $0x48] sm:$0xff]
      %v306 = vld [vmem:[%s1 + $0x50] sm:$0xff]
      %v307 = vld [vmem:[%s1 + $0x58] sm:$0xff]
      %v308 = vld [vmem:[%s1 + $0x60] sm:$0xff]
      %v309 = vld [vmem:[%s1 + $0x68] sm:$0xff]
      %v310 = vld [vmem:[%s1 + $0x70] sm:$0xff]
      %v311 = vld [vmem:[%s1 + $0x78] sm:$0xff]
      %v312 = vld [vmem:[%s1 + $0x80] sm:$0xf]
      %v313 = vld [vmem:[%s1 + $0x88] sm:$0xf]
      %v314 = vld [vmem:[%s1 + $0x90] sm:$0xf]
      %v315 = vld [vmem:[%s1 + $0x98] sm:$0xf]
      %v316 = vld [vmem:[%s2] sm:$0xf]
      %v318 = vlaneseq
      %v319 = vshrl.u32 %v318, 7
      %v320 = vsub.s32 0, %v319
      %v321 = vrot.slane %v316, %v320
      %v322 = vlaneseq
      %v323 = vshrl.u32 %v322, 7
      %v324 = vsub.s32 1, %v323
      %v325 = vrot.slane %v316, %v324
      %v326 = vlaneseq
      %v327 = vshrl.u32 %v326, 7
      %v328 = vsub.s32 2, %v327
      %v329 = vrot.slane %v316, %v328
      %v330 = vlaneseq
      %v331 = vshrl.u32 %v330, 7
      %v332 = vsub.s32 3, %v331
      %v333 = vrot.slane %v316, %v332
      %vm338 = vcmask 293888
      %v340 = vsel %vm338, %v264, 0
      %v343 = vsel %vm338, %v265, 0
      %v346 = vsel %vm338, %v266, 0
      %v349 = vsel %vm338, %v267, 0
      %v352 = vsel %vm338, %v268, 0
      %v355 = vsel %vm338, %v269, 0
      %v358 = vsel %vm338, %v270, 0
      %v361 = vsel %vm338, %v271, 0
      %v364 = vsel %vm338, %v272, 0
      %v367 = vsel %vm338, %v273, 0
      %v370 = vsel %vm338, %v274, 0
      %v373 = vsel %vm338, %v275, 0
      %v376 = vsel %vm338, %v276, 0
      %v379 = vsel %vm338, %v277, 0
      %v382 = vsel %vm338, %v278, 0
      %v385 = vsel %vm338, %v279, 0
      %v388 = vsel %vm338, %v280, 0
      %v391 = vsel %vm338, %v281, 0
      %v394 = vsel %vm338, %v282, 0
      %v397 = vsel %vm338, %v283, 0
      %v400 = vsel %vm338, %v284, 0
      %v403 = vsel %vm338, %v285, 0
      %v406 = vsel %vm338, %v286, 0
      %v409 = vsel %vm338, %v287, 0
      %v412 = vsel %vm338, %v288, 0
      %v415 = vsel %vm338, %v289, 0
      %v418 = vsel %vm338, %v290, 0
      %v421 = vsel %vm338, %v291, 0
      %v424 = vsel %vm338, %v292, 0
      %v427 = vsel %vm338, %v293, 0
      %v430 = vsel %vm338, %v294, 0
      %v433 = vsel %vm338, %v295, 0
      %vm435 = vcmask 1043456
      %v437 = vsel %vm435, %v312, 0
      %v440 = vsel %vm435, %v313, 0
      %v443 = vsel %vm435, %v314, 0
      %v446 = vsel %vm435, %v315, 0
      %448 = vmatprep.subr.mxu0 %v297
      %449 = vmatpush1.msra.mxu0 %v296
      %450 = vmatprep.subr.mxu0 %v301
      %451 = vmatpush1.msra.mxu0 %v300
      %452 = vmatprep.subr.mxu0 %v305
      %453 = vmatpush1.msra.mxu0 %v304
      %454 = vmatprep.subr.mxu0 %v309
      %455 = vmatpush1.msra.mxu0 %v308
      %456 = vmatprep.subr.mxu0 %v440
      %457 = vmatpush1.msra.mxu0 %v437
      %458 = vmatprep.subr.mxu0 0.0
      %459 = vmatpush1.msra.mxu0 0.0
      %460 = vmatprep.subr.mxu0 0.0
      %461 = vmatpush1.msra.mxu0 0.0
      %462 = vmatprep.subr.mxu0 0.0
      %463 = vmatpush1.msra.mxu0 0.0
      %464 = vmatprep.subr.mxu0 0.0
      %465 = vmatpush1.msra.mxu0 0.0
      %466 = vmatprep.subr.mxu0 0.0
      %467 = vmatpush1.msra.mxu0 0.0
      %468 = vmatprep.subr.mxu0 0.0
      %469 = vmatpush1.msra.mxu0 0.0
      %470 = vmatprep.subr.mxu0 0.0
      %471 = vmatpush1.msra.mxu0 0.0
      %472 = vmatprep.subr.mxu0 0.0
      %473 = vmatpush1.msra.mxu0 0.0
      %474 = vmatprep.subr.mxu0 0.0
      %475 = vmatpush1.msra.mxu0 0.0
      %476 = vmatprep.subr.mxu0 0.0
      %477 = vmatpush1.msra.mxu0 0.0
      %478 = vmatprep.subr.mxu0 0.0
      %479 = vmatpush1.msra.mxu0 0.0
      %480 = vmatprep.subr.mxu0 0.0
      %481 = vmatpush1.msra.mxu0 0.0
      %482 = vmatprep.subr.mxu0 0.0
      %483 = vmatpush1.msra.mxu0 0.0
      %484 = vmatprep.subr.mxu0 0.0
      %485 = vmatpush1.msra.mxu0 0.0
      %486 = vmatprep.subr.mxu0 0.0
      %487 = vmatpush1.msra.mxu0 0.0
      %488 = vmatprep.subr.mxu0 0.0
      %489 = vmatpush1.msra.mxu0 0.0
      %490 = vmatprep.subr.mxu0 0.0
      %491 = vmatpush1.msra.mxu0 0.0
      %492 = vmatprep.subr.mxu0 0.0
      %493 = vmatpush1.msra.mxu0 0.0
      %494 = vmatprep.subr.mxu0 0.0
      %495 = vmatpush1.msra.mxu0 0.0
      %496 = vmatprep.subr.mxu0 0.0
      %497 = vmatpush1.msra.mxu0 0.0
      %498 = vmatprep.subr.mxu0 0.0
      %499 = vmatpush1.msra.mxu0 0.0
      %500 = vmatprep.subr.mxu0 0.0
      %501 = vmatpush1.msra.mxu0 0.0
      %502 = vmatprep.subr.mxu0 0.0
      %503 = vmatpush1.msra.mxu0 0.0
      %504 = vmatprep.subr.mxu0 0.0
      %505 = vmatpush1.msra.mxu0 0.0
      %506 = vmatprep.subr.mxu0 0.0
      %507 = vmatpush1.msra.mxu0 0.0
      %508 = vmatprep.subr.mxu0 0.0
      %509 = vmatpush1.msra.mxu0 0.0
      %510 = vmatprep.subr.mxu0 0.0
      %511 = vmatpush1.msra.mxu0 0.0
      %512 = vmatprep.mubr.f32.mxu0 0.0
      %513 = vmatmul.mubr.f32.gmra.mrb[0].mxu0 %v340
      %v514 = vpop.f32.mrb[0].mxu0
      %v515 = vadd.f32 %v321, %v514
      %v516 = vpop.f32.mrb[0].mxu0
      %v517 = vadd.f32 %v325, %v516
      %518 = vmatprep.mubr.f32.mxu0 0.0
      %519 = vmatmul.mubr.f32.gmra.mrb[0].mxu0 %v343
      %v520 = vpop.f32.mrb[0].mxu0
      %v521 = vadd.f32 %v321, %v520
      %v522 = vpop.f32.mrb[0].mxu0
      %v523 = vadd.f32 %v325, %v522
      %524 = vmatprep.mubr.f32.mxu0 0.0
      %525 = vmatmul.mubr.f32.gmra.mrb[0].mxu0 %v346
      %v526 = vpop.f32.mrb[0].mxu0
      %v527 = vadd.f32 %v321, %v526
      %v528 = vpop.f32.mrb[0].mxu0
      %v529 = vadd.f32 %v325, %v528
      %530 = vmatprep.mubr.f32.mxu0 0.0
      %531 = vmatmul.mubr.f32.gmra.mrb[0].mxu0 %v349
      %v532 = vpop.f32.mrb[0].mxu0
      %v533 = vadd.f32 %v321, %v532
      %v534 = vpop.f32.mrb[0].mxu0
      %v535 = vadd.f32 %v325, %v534
      %536 = vmatprep.mubr.f32.mxu0 0.0
      %537 = vmatmul.mubr.f32.gmra.mrb[0].mxu0 %v352
      %v538 = vpop.f32.mrb[0].mxu0
      %v539 = vadd.f32 %v321, %v538
      %v540 = vpop.f32.mrb[0].mxu0
      %v541 = vadd.f32 %v325, %v540
      %542 = vmatprep.mubr.f32.mxu0 0.0
      %543 = vmatmul.mubr.f32.gmra.mrb[0].mxu0 %v355
      %v544 = vpop.f32.mrb[0].mxu0
      %v545 = vadd.f32 %v321, %v544
      %v546 = vpop.f32.mrb[0].mxu0
      %v547 = vadd.f32 %v325, %v546
      %548 = vmatprep.mubr.f32.mxu0 0.0
      %549 = vmatmul.mubr.f32.gmra.mrb[0].mxu0 %v358
      %v550 = vpop.f32.mrb[0].mxu0
      %v551 = vadd.f32 %v321, %v550
      %v552 = vpop.f32.mrb[0].mxu0
      %v553 = vadd.f32 %v325, %v552
      %554 = vmatprep.mubr.f32.mxu0 0.0
      %555 = vmatmul.mubr.f32.gmra.mrb[0].mxu0 %v361
      %v556 = vpop.f32.mrb[0].mxu0
      %v557 = vadd.f32 %v321, %v556
      %v558 = vpop.f32.mrb[0].mxu0
      %v559 = vadd.f32 %v325, %v558
      %560 = vmatprep.mubr.f32.mxu0 0.0
      %561 = vmatmul.mubr.f32.gmra.mrb[0].mxu0 %v364
      %v562 = vpop.f32.mrb[0].mxu0
      %v563 = vadd.f32 %v321, %v562
      %v564 = vpop.f32.mrb[0].mxu0
      %v565 = vadd.f32 %v325, %v564
      %566 = vmatprep.mubr.f32.mxu0 0.0
      %567 = vmatmul.mubr.f32.gmra.mrb[0].mxu0 %v367
      %v568 = vpop.f32.mrb[0].mxu0
      %v569 = vadd.f32 %v321, %v568
      %v570 = vpop.f32.mrb[0].mxu0
      %v571 = vadd.f32 %v325, %v570
      %572 = vmatprep.mubr.f32.mxu0 0.0
      %573 = vmatmul.mubr.f32.gmra.mrb[0].mxu0 %v370
      %v574 = vpop.f32.mrb[0].mxu0
      %v575 = vadd.f32 %v321, %v574
      %v576 = vpop.f32.mrb[0].mxu0
      %v577 = vadd.f32 %v325, %v576
      %578 = vmatprep.mubr.f32.mxu0 0.0
      %579 = vmatmul.mubr.f32.gmra.mrb[0].mxu0 %v373
      %v580 = vpop.f32.mrb[0].mxu0
      %v581 = vadd.f32 %v321, %v580
      %v582 = vpop.f32.mrb[0].mxu0
      %v583 = vadd.f32 %v325, %v582
      %584 = vmatprep.mubr.f32.mxu0 0.0
      %585 = vmatmul.mubr.f32.gmra.mrb[0].mxu0 %v376
      %v586 = vpop.f32.mrb[0].mxu0
      %v587 = vadd.f32 %v321, %v586
      %v588 = vpop.f32.mrb[0].mxu0
      %v589 = vadd.f32 %v325, %v588
      %590 = vmatprep.mubr.f32.mxu0 0.0
      %591 = vmatmul.mubr.f32.gmra.mrb[0].mxu0 %v379
      %v592 = vpop.f32.mrb[0].mxu0
      %v593 = vadd.f32 %v321, %v592
      %v594 = vpop.f32.mrb[0].mxu0
      %v595 = vadd.f32 %v325, %v594
      %596 = vmatprep.mubr.f32.mxu0 0.0
      %597 = vmatmul.mubr.f32.gmra.mrb[0].mxu0 %v382
      %v598 = vpop.f32.mrb[0].mxu0
      %v599 = vadd.f32 %v321, %v598
      %v600 = vpop.f32.mrb[0].mxu0
      %v601 = vadd.f32 %v325, %v600
      %602 = vmatprep.mubr.f32.mxu0 0.0
      %603 = vmatmul.mubr.f32.gmra.mrb[0].mxu0 %v385
      %v604 = vpop.f32.mrb[0].mxu0
      %v605 = vadd.f32 %v321, %v604
      %v606 = vpop.f32.mrb[0].mxu0
      %v607 = vadd.f32 %v325, %v606
      %608 = vmatprep.mubr.f32.mxu0 0.0
      %609 = vmatmul.mubr.f32.gmra.mrb[0].mxu0 %v388
      %v610 = vpop.f32.mrb[0].mxu0
      %v611 = vadd.f32 %v321, %v610
      %v612 = vpop.f32.mrb[0].mxu0
      %v613 = vadd.f32 %v325, %v612
      %614 = vmatprep.mubr.f32.mxu0 0.0
      %615 = vmatmul.mubr.f32.gmra.mrb[0].mxu0 %v391
      %v616 = vpop.f32.mrb[0].mxu0
      %v617 = vadd.f32 %v321, %v616
      %v618 = vpop.f32.mrb[0].mxu0
      %v619 = vadd.f32 %v325, %v618
      %620 = vmatprep.mubr.f32.mxu0 0.0
      %621 = vmatmul.mubr.f32.gmra.mrb[0].mxu0 %v394
      %v622 = vpop.f32.mrb[0].mxu0
      %v623 = vadd.f32 %v321, %v622
      %v624 = vpop.f32.mrb[0].mxu0
      %v625 = vadd.f32 %v325, %v624
      %626 = vmatprep.mubr.f32.mxu0 0.0
      %627 = vmatmul.mubr.f32.gmra.mrb[0].mxu0 %v397
      %v628 = vpop.f32.mrb[0].mxu0
      %v629 = vadd.f32 %v321, %v628
      %v630 = vpop.f32.mrb[0].mxu0
      %v631 = vadd.f32 %v325, %v630
      %632 = vmatprep.mubr.f32.mxu0 0.0
      %633 = vmatmul.mubr.f32.gmra.mrb[0].mxu0 %v400
      %v634 = vpop.f32.mrb[0].mxu0
      %v635 = vadd.f32 %v321, %v634
      %v636 = vpop.f32.mrb[0].mxu0
      %v637 = vadd.f32 %v325, %v636
      %638 = vmatprep.mubr.f32.mxu0 0.0
      %639 = vmatmul.mubr.f32.gmra.mrb[0].mxu0 %v403
      %v640 = vpop.f32.mrb[0].mxu0
      %v641 = vadd.f32 %v321, %v640
      %v642 = vpop.f32.mrb[0].mxu0
      %v643 = vadd.f32 %v325, %v642
      %644 = vmatprep.mubr.f32.mxu0 0.0
      %645 = vmatmul.mubr.f32.gmra.mrb[0].mxu0 %v406
      %v646 = vpop.f32.mrb[0].mxu0
      %v647 = vadd.f32 %v321, %v646
      %v648 = vpop.f32.mrb[0].mxu0
      %v649 = vadd.f32 %v325, %v648
      %650 = vmatprep.mubr.f32.mxu0 0.0
      %651 = vmatmul.mubr.f32.gmra.mrb[0].mxu0 %v409
      %v652 = vpop.f32.mrb[0].mxu0
      %v653 = vadd.f32 %v321, %v652
      %v654 = vpop.f32.mrb[0].mxu0
      %v655 = vadd.f32 %v325, %v654
      %656 = vmatprep.mubr.f32.mxu0 0.0
      %657 = vmatmul.mubr.f32.gmra.mrb[0].mxu0 %v412
      %v658 = vpop.f32.mrb[0].mxu0
      %v659 = vadd.f32 %v321, %v658
      %v660 = vpop.f32.mrb[0].mxu0
      %v661 = vadd.f32 %v325, %v660
      %662 = vmatprep.mubr.f32.mxu0 0.0
      %663 = vmatmul.mubr.f32.gmra.mrb[0].mxu0 %v415
      %v664 = vpop.f32.mrb[0].mxu0
      %v665 = vadd.f32 %v321, %v664
      %v666 = vpop.f32.mrb[0].mxu0
      %v667 = vadd.f32 %v325, %v666
      %668 = vmatprep.mubr.f32.mxu0 0.0
      %669 = vmatmul.mubr.f32.gmra.mrb[0].mxu0 %v418
      %v670 = vpop.f32.mrb[0].mxu0
      %v671 = vadd.f32 %v321, %v670
      %v672 = vpop.f32.mrb[0].mxu0
      %v673 = vadd.f32 %v325, %v672
      %674 = vmatprep.mubr.f32.mxu0 0.0
      %675 = vmatmul.mubr.f32.gmra.mrb[0].mxu0 %v421
      %v676 = vpop.f32.mrb[0].mxu0
      %v677 = vadd.f32 %v321, %v676
      %v678 = vpop.f32.mrb[0].mxu0
      %v679 = vadd.f32 %v325, %v678
      %680 = vmatprep.mubr.f32.mxu0 0.0
      %681 = vmatmul.mubr.f32.gmra.mrb[0].mxu0 %v424
      %v682 = vpop.f32.mrb[0].mxu0
      %v683 = vadd.f32 %v321, %v682
      %v684 = vpop.f32.mrb[0].mxu0
      %v685 = vadd.f32 %v325, %v684
      %686 = vmatprep.mubr.f32.mxu0 0.0
      %687 = vmatmul.mubr.f32.gmra.mrb[0].mxu0 %v427
      %v688 = vpop.f32.mrb[0].mxu0
      %v689 = vadd.f32 %v321, %v688
      %v690 = vpop.f32.mrb[0].mxu0
      %v691 = vadd.f32 %v325, %v690
      %692 = vmatprep.mubr.f32.mxu0 0.0
      %693 = vmatmul.mubr.f32.gmra.mrb[0].mxu0 %v430
      %v694 = vpop.f32.mrb[0].mxu0
      %v695 = vadd.f32 %v321, %v694
      %v696 = vpop.f32.mrb[0].mxu0
      %v697 = vadd.f32 %v325, %v696
      %698 = vmatprep.mubr.f32.mxu0 0.0
      %699 = vmatmul.mubr.f32.gmra.mrb[0].mxu0 %v433
      %v700 = vpop.f32.mrb[0].mxu0
      %v701 = vadd.f32 %v321, %v700
      %v702 = vpop.f32.mrb[0].mxu0
      %v703 = vadd.f32 %v325, %v702
      %704 = vdwg.mxu0
      %705 = vmatprep.subr.mxu0 %v299
      %706 = vmatpush1.msra.mxu0 %v298
      %707 = vmatprep.subr.mxu0 %v303
      %708 = vmatpush1.msra.mxu0 %v302
      %709 = vmatprep.subr.mxu0 %v307
      %710 = vmatpush1.msra.mxu0 %v306
      %711 = vmatprep.subr.mxu0 %v311
      %712 = vmatpush1.msra.mxu0 %v310
      %713 = vmatprep.subr.mxu0 %v446
      %714 = vmatpush1.msra.mxu0 %v443
      %715 = vmatprep.subr.mxu0 0.0
      %716 = vmatpush1.msra.mxu0 0.0
      %717 = vmatprep.subr.mxu0 0.0
      %718 = vmatpush1.msra.mxu0 0.0
      %719 = vmatprep.subr.mxu0 0.0
      %720 = vmatpush1.msra.mxu0 0.0
      %721 = vmatprep.subr.mxu0 0.0
      %722 = vmatpush1.msra.mxu0 0.0
      %723 = vmatprep.subr.mxu0 0.0
      %724 = vmatpush1.msra.mxu0 0.0
      %725 = vmatprep.subr.mxu0 0.0
      %726 = vmatpush1.msra.mxu0 0.0
      %727 = vmatprep.subr.mxu0 0.0
      %728 = vmatpush1.msra.mxu0 0.0
      %729 = vmatprep.subr.mxu0 0.0
      %730 = vmatpush1.msra.mxu0 0.0
      %731 = vmatprep.subr.mxu0 0.0
      %732 = vmatpush1.msra.mxu0 0.0
      %733 = vmatprep.subr.mxu0 0.0
      %734 = vmatpush1.msra.mxu0 0.0
      %735 = vmatprep.subr.mxu0 0.0
      %736 = vmatpush1.msra.mxu0 0.0
      %737 = vmatprep.subr.mxu0 0.0
      %738 = vmatpush1.msra.mxu0 0.0
      %739 = vmatprep.subr.mxu0 0.0
      %740 = vmatpush1.msra.mxu0 0.0
      %741 = vmatprep.subr.mxu0 0.0
      %742 = vmatpush1.msra.mxu0 0.0
      %743 = vmatprep.subr.mxu0 0.0
      %744 = vmatpush1.msra.mxu0 0.0
      %745 = vmatprep.subr.mxu0 0.0
      %746 = vmatpush1.msra.mxu0 0.0
      %747 = vmatprep.subr.mxu0 0.0
      %748 = vmatpush1.msra.mxu0 0.0
      %749 = vmatprep.subr.mxu0 0.0
      %750 = vmatpush1.msra.mxu0 0.0
      %751 = vmatprep.subr.mxu0 0.0
      %752 = vmatpush1.msra.mxu0 0.0
      %753 = vmatprep.subr.mxu0 0.0
      %754 = vmatpush1.msra.mxu0 0.0
      %755 = vmatprep.subr.mxu0 0.0
      %756 = vmatpush1.msra.mxu0 0.0
      %757 = vmatprep.subr.mxu0 0.0
      %758 = vmatpush1.msra.mxu0 0.0
      %759 = vmatprep.subr.mxu0 0.0
      %760 = vmatpush1.msra.mxu0 0.0
      %761 = vmatprep.subr.mxu0 0.0
      %762 = vmatpush1.msra.mxu0 0.0
      %763 = vmatprep.subr.mxu0 0.0
      %764 = vmatpush1.msra.mxu0 0.0
      %765 = vmatprep.subr.mxu0 0.0
      %766 = vmatpush1.msra.mxu0 0.0
      %767 = vmatprep.subr.mxu0 0.0
      %768 = vmatpush1.msra.mxu0 0.0
      %769 = vmatprep.mubr.f32.mxu0 0.0
      %770 = vmatmul.mubr.f32.gmra.mrb[0].mxu0 %v340
      %v771 = vpop.f32.mrb[0].mxu0
      %v772 = vadd.f32 %v329, %v771
      %v773 = vpop.f32.mrb[0].mxu0
      %v774 = vadd.f32 %v333, %v773
      %775 = vmatprep.mubr.f32.mxu0 0.0
      %776 = vmatmul.mubr.f32.gmra.mrb[0].mxu0 %v343
      %v777 = vpop.f32.mrb[0].mxu0
      %v778 = vadd.f32 %v329, %v777
      %v779 = vpop.f32.mrb[0].mxu0
      %v780 = vadd.f32 %v333, %v779
      %781 = vmatprep.mubr.f32.mxu0 0.0
      %782 = vmatmul.mubr.f32.gmra.mrb[0].mxu0 %v346
      %v783 = vpop.f32.mrb[0].mxu0
      %v784 = vadd.f32 %v329, %v783
      %v785 = vpop.f32.mrb[0].mxu0
      %v786 = vadd.f32 %v333, %v785
      %787 = vmatprep.mubr.f32.mxu0 0.0
      %788 = vmatmul.mubr.f32.gmra.mrb[0].mxu0 %v349
      %v789 = vpop.f32.mrb[0].mxu0
      %v790 = vadd.f32 %v329, %v789
      %v791 = vpop.f32.mrb[0].mxu0
      %v792 = vadd.f32 %v333, %v791
      %793 = vmatprep.mubr.f32.mxu0 0.0
      %794 = vmatmul.mubr.f32.gmra.mrb[0].mxu0 %v352
      %v795 = vpop.f32.mrb[0].mxu0
      %v796 = vadd.f32 %v329, %v795
      %v797 = vpop.f32.mrb[0].mxu0
      %v798 = vadd.f32 %v333, %v797
      %799 = vmatprep.mubr.f32.mxu0 0.0
      %800 = vmatmul.mubr.f32.gmra.mrb[0].mxu0 %v355
      %v801 = vpop.f32.mrb[0].mxu0
      %v802 = vadd.f32 %v329, %v801
      %v803 = vpop.f32.mrb[0].mxu0
      %v804 = vadd.f32 %v333, %v803
      %805 = vmatprep.mubr.f32.mxu0 0.0
      %806 = vmatmul.mubr.f32.gmra.mrb[0].mxu0 %v358
      %v807 = vpop.f32.mrb[0].mxu0
      %v808 = vadd.f32 %v329, %v807
      %v809 = vpop.f32.mrb[0].mxu0
      %v810 = vadd.f32 %v333, %v809
      %811 = vmatprep.mubr.f32.mxu0 0.0
      %812 = vmatmul.mubr.f32.gmra.mrb[0].mxu0 %v361
      %v813 = vpop.f32.mrb[0].mxu0
      %v814 = vadd.f32 %v329, %v813
      %v815 = vpop.f32.mrb[0].mxu0
      %v816 = vadd.f32 %v333, %v815
      %817 = vmatprep.mubr.f32.mxu0 0.0
      %818 = vmatmul.mubr.f32.gmra.mrb[0].mxu0 %v364
      %v819 = vpop.f32.mrb[0].mxu0
      %v820 = vadd.f32 %v329, %v819
      %v821 = vpop.f32.mrb[0].mxu0
      %v822 = vadd.f32 %v333, %v821
      %823 = vmatprep.mubr.f32.mxu0 0.0
      %824 = vmatmul.mubr.f32.gmra.mrb[0].mxu0 %v367
      %v825 = vpop.f32.mrb[0].mxu0
      %v826 = vadd.f32 %v329, %v825
      %v827 = vpop.f32.mrb[0].mxu0
      %v828 = vadd.f32 %v333, %v827
      %829 = vmatprep.mubr.f32.mxu0 0.0
      %830 = vmatmul.mubr.f32.gmra.mrb[0].mxu0 %v370
      %v831 = vpop.f32.mrb[0].mxu0
      %v832 = vadd.f32 %v329, %v831
      %v833 = vpop.f32.mrb[0].mxu0
      %v834 = vadd.f32 %v333, %v833
      %835 = vmatprep.mubr.f32.mxu0 0.0
      %836 = vmatmul.mubr.f32.gmra.mrb[0].mxu0 %v373
      %v837 = vpop.f32.mrb[0].mxu0
      %v838 = vadd.f32 %v329, %v837
      %v839 = vpop.f32.mrb[0].mxu0
      %v840 = vadd.f32 %v333, %v839
      %841 = vmatprep.mubr.f32.mxu0 0.0
      %842 = vmatmul.mubr.f32.gmra.mrb[0].mxu0 %v376
      %v843 = vpop.f32.mrb[0].mxu0
      %v844 = vadd.f32 %v329, %v843
      %v845 = vpop.f32.mrb[0].mxu0
      %v846 = vadd.f32 %v333, %v845
      %847 = vmatprep.mubr.f32.mxu0 0.0
      %848 = vmatmul.mubr.f32.gmra.mrb[0].mxu0 %v379
      %v849 = vpop.f32.mrb[0].mxu0
      %v850 = vadd.f32 %v329, %v849
      %v851 = vpop.f32.mrb[0].mxu0
      %v852 = vadd.f32 %v333, %v851
      %853 = vmatprep.mubr.f32.mxu0 0.0
      %854 = vmatmul.mubr.f32.gmra.mrb[0].mxu0 %v382
      %v855 = vpop.f32.mrb[0].mxu0
      %v856 = vadd.f32 %v329, %v855
      %v857 = vpop.f32.mrb[0].mxu0
      %v858 = vadd.f32 %v333, %v857
      %859 = vmatprep.mubr.f32.mxu0 0.0
      %860 = vmatmul.mubr.f32.gmra.mrb[0].mxu0 %v385
      %v861 = vpop.f32.mrb[0].mxu0
      %v862 = vadd.f32 %v329, %v861
      %v863 = vpop.f32.mrb[0].mxu0
      %v864 = vadd.f32 %v333, %v863
      %865 = vmatprep.mubr.f32.mxu0 0.0
      %866 = vmatmul.mubr.f32.gmra.mrb[0].mxu0 %v388
      %v867 = vpop.f32.mrb[0].mxu0
      %v868 = vadd.f32 %v329, %v867
      %v869 = vpop.f32.mrb[0].mxu0
      %v870 = vadd.f32 %v333, %v869
      %871 = vmatprep.mubr.f32.mxu0 0.0
      %872 = vmatmul.mubr.f32.gmra.mrb[0].mxu0 %v391
      %v873 = vpop.f32.mrb[0].mxu0
      %v874 = vadd.f32 %v329, %v873
      %v875 = vpop.f32.mrb[0].mxu0
      %v876 = vadd.f32 %v333, %v875
      %877 = vmatprep.mubr.f32.mxu0 0.0
      %878 = vmatmul.mubr.f32.gmra.mrb[0].mxu0 %v394
      %v879 = vpop.f32.mrb[0].mxu0
      %v880 = vadd.f32 %v329, %v879
      %v881 = vpop.f32.mrb[0].mxu0
      %v882 = vadd.f32 %v333, %v881
      %883 = vmatprep.mubr.f32.mxu0 0.0
      %884 = vmatmul.mubr.f32.gmra.mrb[0].mxu0 %v397
      %v885 = vpop.f32.mrb[0].mxu0
      %v886 = vadd.f32 %v329, %v885
      %v887 = vpop.f32.mrb[0].mxu0
      %v888 = vadd.f32 %v333, %v887
      %889 = vmatprep.mubr.f32.mxu0 0.0
      %890 = vmatmul.mubr.f32.gmra.mrb[0].mxu0 %v400
      %v891 = vpop.f32.mrb[0].mxu0
      %v892 = vadd.f32 %v329, %v891
      %v893 = vpop.f32.mrb[0].mxu0
      %v894 = vadd.f32 %v333, %v893
      %895 = vmatprep.mubr.f32.mxu0 0.0
      %896 = vmatmul.mubr.f32.gmra.mrb[0].mxu0 %v403
      %v897 = vpop.f32.mrb[0].mxu0
      %v898 = vadd.f32 %v329, %v897
      %v899 = vpop.f32.mrb[0].mxu0
      %v900 = vadd.f32 %v333, %v899
      %901 = vmatprep.mubr.f32.mxu0 0.0
      %902 = vmatmul.mubr.f32.gmra.mrb[0].mxu0 %v406
      %v903 = vpop.f32.mrb[0].mxu0
      %v904 = vadd.f32 %v329, %v903
      %v905 = vpop.f32.mrb[0].mxu0
      %v906 = vadd.f32 %v333, %v905
      %907 = vmatprep.mubr.f32.mxu0 0.0
      %908 = vmatmul.mubr.f32.gmra.mrb[0].mxu0 %v409
      %v909 = vpop.f32.mrb[0].mxu0
      %v910 = vadd.f32 %v329, %v909
      %v911 = vpop.f32.mrb[0].mxu0
      %v912 = vadd.f32 %v333, %v911
      %913 = vmatprep.mubr.f32.mxu0 0.0
      %914 = vmatmul.mubr.f32.gmra.mrb[0].mxu0 %v412
      %v915 = vpop.f32.mrb[0].mxu0
      %v916 = vadd.f32 %v329, %v915
      %v917 = vpop.f32.mrb[0].mxu0
      %v918 = vadd.f32 %v333, %v917
      %919 = vmatprep.mubr.f32.mxu0 0.0
      %920 = vmatmul.mubr.f32.gmra.mrb[0].mxu0 %v415
      %v921 = vpop.f32.mrb[0].mxu0
      %v922 = vadd.f32 %v329, %v921
      %v923 = vpop.f32.mrb[0].mxu0
      %v924 = vadd.f32 %v333, %v923
      %925 = vmatprep.mubr.f32.mxu0 0.0
      %926 = vmatmul.mubr.f32.gmra.mrb[0].mxu0 %v418
      %v927 = vpop.f32.mrb[0].mxu0
      %v928 = vadd.f32 %v329, %v927
      %v929 = vpop.f32.mrb[0].mxu0
      %v930 = vadd.f32 %v333, %v929
      %931 = vmatprep.mubr.f32.mxu0 0.0
      %932 = vmatmul.mubr.f32.gmra.mrb[0].mxu0 %v421
      %v933 = vpop.f32.mrb[0].mxu0
      %v934 = vadd.f32 %v329, %v933
      %v935 = vpop.f32.mrb[0].mxu0
      %v936 = vadd.f32 %v333, %v935
      %937 = vmatprep.mubr.f32.mxu0 0.0
      %938 = vmatmul.mubr.f32.gmra.mrb[0].mxu0 %v424
      %v939 = vpop.f32.mrb[0].mxu0
      %v940 = vadd.f32 %v329, %v939
      %v941 = vpop.f32.mrb[0].mxu0
      %v942 = vadd.f32 %v333, %v941
      %943 = vmatprep.mubr.f32.mxu0 0.0
      %944 = vmatmul.mubr.f32.gmra.mrb[0].mxu0 %v427
      %v945 = vpop.f32.mrb[0].mxu0
      %v946 = vadd.f32 %v329, %v945
      %v947 = vpop.f32.mrb[0].mxu0
      %v948 = vadd.f32 %v333, %v947
      %949 = vmatprep.mubr.f32.mxu0 0.0
      %950 = vmatmul.mubr.f32.gmra.mrb[0].mxu0 %v430
      %v951 = vpop.f32.mrb[0].mxu0
      %v952 = vadd.f32 %v329, %v951
      %v953 = vpop.f32.mrb[0].mxu0
      %v954 = vadd.f32 %v333, %v953
      %955 = vmatprep.mubr.f32.mxu0 0.0
      %956 = vmatmul.mubr.f32.gmra.mrb[0].mxu0 %v433
      %v957 = vpop.f32.mrb[0].mxu0
      %v958 = vadd.f32 %v329, %v957
      %v959 = vpop.f32.mrb[0].mxu0
      %v960 = vadd.f32 %v333, %v959
      %961 = vdwg.mxu0
      %v962 = vmax.f32 %v515, 0.0
      %v963 = vmax.f32 %v517, 0.0
      %v964 = vmax.f32 %v772, 0.0
      %v965 = vmax.f32 %v774, 0.0
      %v966 = vmax.f32 %v521, 0.0
      %v967 = vmax.f32 %v523, 0.0
      %v968 = vmax.f32 %v778, 0.0
      %v969 = vmax.f32 %v780, 0.0
      %v970 = vmax.f32 %v527, 0.0
      %v971 = vmax.f32 %v529, 0.0
      %v972 = vmax.f32 %v784, 0.0
      %v973 = vmax.f32 %v786, 0.0
      %v974 = vmax.f32 %v533, 0.0
      %v975 = vmax.f32 %v535, 0.0
      %v976 = vmax.f32 %v790, 0.0
      %v977 = vmax.f32 %v792, 0.0
      %v978 = vmax.f32 %v539, 0.0
      %v979 = vmax.f32 %v541, 0.0
      %v980 = vmax.f32 %v796, 0.0
      %v981 = vmax.f32 %v798, 0.0
      %v982 = vmax.f32 %v545, 0.0
      %v983 = vmax.f32 %v547, 0.0
      %v984 = vmax.f32 %v802, 0.0
      %v985 = vmax.f32 %v804, 0.0
      %v986 = vmax.f32 %v551, 0.0
      %v987 = vmax.f32 %v553, 0.0
      %v988 = vmax.f32 %v808, 0.0
      %v989 = vmax.f32 %v810, 0.0
      %v990 = vmax.f32 %v557, 0.0
      %v991 = vmax.f32 %v559, 0.0
      %v992 = vmax.f32 %v814, 0.0
      %v993 = vmax.f32 %v816, 0.0
      %v994 = vmax.f32 %v563, 0.0
      %v995 = vmax.f32 %v565, 0.0
      %v996 = vmax.f32 %v820, 0.0
      %v997 = vmax.f32 %v822, 0.0
      %v998 = vmax.f32 %v569, 0.0
      %v999 = vmax.f32 %v571, 0.0
      %v1000 = vmax.f32 %v826, 0.0
      %v1001 = vmax.f32 %v828, 0.0
      %v1002 = vmax.f32 %v575, 0.0
      %v1003 = vmax.f32 %v577, 0.0
      %v1004 = vmax.f32 %v832, 0.0
      %v1005 = vmax.f32 %v834, 0.0
      %v1006 = vmax.f32 %v581, 0.0
      %v1007 = vmax.f32 %v583, 0.0
      %v1008 = vmax.f32 %v838, 0.0
      %v1009 = vmax.f32 %v840, 0.0
      %v1010 = vmax.f32 %v587, 0.0
      %v1011 = vmax.f32 %v589, 0.0
      %v1012 = vmax.f32 %v844, 0.0
      %v1013 = vmax.f32 %v846, 0.0
      %v1014 = vmax.f32 %v593, 0.0
      %v1015 = vmax.f32 %v595, 0.0
      %v1016 = vmax.f32 %v850, 0.0
      %v1017 = vmax.f32 %v852, 0.0
      %v1018 = vmax.f32 %v599, 0.0
      %v1019 = vmax.f32 %v601, 0.0
      %v1020 = vmax.f32 %v856, 0.0
      %v1021 = vmax.f32 %v858, 0.0
      %v1022 = vmax.f32 %v605, 0.0
      %v1023 = vmax.f32 %v607, 0.0
      %v1024 = vmax.f32 %v862, 0.0
      %v1025 = vmax.f32 %v864, 0.0
      %v1026 = vmax.f32 %v611, 0.0
      %v1027 = vmax.f32 %v613, 0.0
      %v1028 = vmax.f32 %v868, 0.0
      %v1029 = vmax.f32 %v870, 0.0
      %v1030 = vmax.f32 %v617, 0.0
      %v1031 = vmax.f32 %v619, 0.0
      %v1032 = vmax.f32 %v874, 0.0
      %v1033 = vmax.f32 %v876, 0.0
      %v1034 = vmax.f32 %v623, 0.0
      %v1035 = vmax.f32 %v625, 0.0
      %v1036 = vmax.f32 %v880, 0.0
      %v1037 = vmax.f32 %v882, 0.0
      %v1038 = vmax.f32 %v629, 0.0
      %v1039 = vmax.f32 %v631, 0.0
      %v1040 = vmax.f32 %v886, 0.0
      %v1041 = vmax.f32 %v888, 0.0
      %v1042 = vmax.f32 %v635, 0.0
      %v1043 = vmax.f32 %v637, 0.0
      %v1044 = vmax.f32 %v892, 0.0
      %v1045 = vmax.f32 %v894, 0.0
      %v1046 = vmax.f32 %v641, 0.0
      %v1047 = vmax.f32 %v643, 0.0
      %v1048 = vmax.f32 %v898, 0.0
      %v1049 = vmax.f32 %v900, 0.0
      %v1050 = vmax.f32 %v647, 0.0
      %v1051 = vmax.f32 %v649, 0.0
      %v1052 = vmax.f32 %v904, 0.0
      %v1053 = vmax.f32 %v906, 0.0
      %v1054 = vmax.f32 %v653, 0.0
      %v1055 = vmax.f32 %v655, 0.0
      %v1056 = vmax.f32 %v910, 0.0
      %v1057 = vmax.f32 %v912, 0.0
      %v1058 = vmax.f32 %v659, 0.0
      %v1059 = vmax.f32 %v661, 0.0
      %v1060 = vmax.f32 %v916, 0.0
      %v1061 = vmax.f32 %v918, 0.0
      %v1062 = vmax.f32 %v665, 0.0
      %v1063 = vmax.f32 %v667, 0.0
      %v1064 = vmax.f32 %v922, 0.0
      %v1065 = vmax.f32 %v924, 0.0
      %v1066 = vmax.f32 %v671, 0.0
      %v1067 = vmax.f32 %v673, 0.0
      %v1068 = vmax.f32 %v928, 0.0
      %v1069 = vmax.f32 %v930, 0.0
      %v1070 = vmax.f32 %v677, 0.0
      %v1071 = vmax.f32 %v679, 0.0
      %v1072 = vmax.f32 %v934, 0.0
      %v1073 = vmax.f32 %v936, 0.0
      %v1074 = vmax.f32 %v683, 0.0
      %v1075 = vmax.f32 %v685, 0.0
      %v1076 = vmax.f32 %v940, 0.0
      %v1077 = vmax.f32 %v942, 0.0
      %v1078 = vmax.f32 %v689, 0.0
      %v1079 = vmax.f32 %v691, 0.0
      %v1080 = vmax.f32 %v946, 0.0
      %v1081 = vmax.f32 %v948, 0.0
      %v1082 = vmax.f32 %v695, 0.0
      %v1083 = vmax.f32 %v697, 0.0
      %v1084 = vmax.f32 %v952, 0.0
      %v1085 = vmax.f32 %v954, 0.0
      %v1086 = vmax.f32 %v701, 0.0
      %v1087 = vmax.f32 %v703, 0.0
      %v1088 = vmax.f32 %v958, 0.0
      %v1089 = vmax.f32 %v960, 0.0
      %v1090 = vld [vmem:[%s3] sm:$0xff]
      %v1091 = vld [vmem:[%s3 + $0x8] sm:$0xff]
      %v1092 = vld [vmem:[%s3 + $0x10] sm:$0xff]
      %v1093 = vld [vmem:[%s3 + $0x18] sm:$0xff]
      %v1094 = vld [vmem:[%s3 + $0x20] sm:$0xff]
      %v1095 = vld [vmem:[%s3 + $0x28] sm:$0xff]
      %v1096 = vld [vmem:[%s3 + $0x30] sm:$0xff]
      %v1097 = vld [vmem:[%s3 + $0x38] sm:$0xff]
      %v1098 = vld [vmem:[%s3 + $0x40] sm:$0xff]
      %v1099 = vld [vmem:[%s3 + $0x48] sm:$0xff]
      %v1100 = vld [vmem:[%s3 + $0x50] sm:$0xff]
      %v1101 = vld [vmem:[%s3 + $0x58] sm:$0xff]
      %v1102 = vld [vmem:[%s3 + $0x60] sm:$0xff]
      %v1103 = vld [vmem:[%s3 + $0x68] sm:$0xff]
      %v1104 = vld [vmem:[%s3 + $0x70] sm:$0xff]
      %v1105 = vld [vmem:[%s3 + $0x78] sm:$0xff]
      %v1106 = vld [vmem:[%s3 + $0x80] sm:$0xff]
      %v1107 = vld [vmem:[%s3 + $0x88] sm:$0xff]
      %v1108 = vld [vmem:[%s3 + $0x90] sm:$0xff]
      %v1109 = vld [vmem:[%s3 + $0x98] sm:$0xff]
      %v1110 = vld [vmem:[%s3 + $0xa0] sm:$0xff]
      %v1111 = vld [vmem:[%s3 + $0xa8] sm:$0xff]
      %v1112 = vld [vmem:[%s3 + $0xb0] sm:$0xff]
      %v1113 = vld [vmem:[%s3 + $0xb8] sm:$0xff]
      %v1114 = vld [vmem:[%s3 + $0xc0] sm:$0xff]
      %v1115 = vld [vmem:[%s3 + $0xc8] sm:$0xff]
      %v1116 = vld [vmem:[%s3 + $0xd0] sm:$0xff]
      %v1117 = vld [vmem:[%s3 + $0xd8] sm:$0xff]
      %v1118 = vld [vmem:[%s3 + $0xe0] sm:$0xff]
      %v1119 = vld [vmem:[%s3 + $0xe8] sm:$0xff]
      %v1120 = vld [vmem:[%s3 + $0xf0] sm:$0xff]
      %v1121 = vld [vmem:[%s3 + $0xf8] sm:$0xff]
      %v1122 = vld [vmem:[%s3 + $0x100] sm:$0xff]
      %v1123 = vld [vmem:[%s3 + $0x108] sm:$0xff]
      %v1124 = vld [vmem:[%s3 + $0x110] sm:$0xff]
      %v1125 = vld [vmem:[%s3 + $0x118] sm:$0xff]
      %v1126 = vld [vmem:[%s3 + $0x120] sm:$0xff]
      %v1127 = vld [vmem:[%s3 + $0x128] sm:$0xff]
      %v1128 = vld [vmem:[%s3 + $0x130] sm:$0xff]
      %v1129 = vld [vmem:[%s3 + $0x138] sm:$0xff]
      %v1130 = vld [vmem:[%s3 + $0x140] sm:$0xff]
      %v1131 = vld [vmem:[%s3 + $0x148] sm:$0xff]
      %v1132 = vld [vmem:[%s3 + $0x150] sm:$0xff]
      %v1133 = vld [vmem:[%s3 + $0x158] sm:$0xff]
      %v1134 = vld [vmem:[%s3 + $0x160] sm:$0xff]
      %v1135 = vld [vmem:[%s3 + $0x168] sm:$0xff]
      %v1136 = vld [vmem:[%s3 + $0x170] sm:$0xff]
      %v1137 = vld [vmem:[%s3 + $0x178] sm:$0xff]
      %v1138 = vld [vmem:[%s3 + $0x180] sm:$0xff]
      %v1139 = vld [vmem:[%s3 + $0x188] sm:$0xff]
      %v1140 = vld [vmem:[%s3 + $0x190] sm:$0xff]
      %v1141 = vld [vmem:[%s3 + $0x198] sm:$0xff]
      %v1142 = vld [vmem:[%s3 + $0x1a0] sm:$0xff]
      %v1143 = vld [vmem:[%s3 + $0x1a8] sm:$0xff]
      %v1144 = vld [vmem:[%s3 + $0x1b0] sm:$0xff]
      %v1145 = vld [vmem:[%s3 + $0x1b8] sm:$0xff]
      %v1146 = vld [vmem:[%s3 + $0x1c0] sm:$0xff]
      %v1147 = vld [vmem:[%s3 + $0x1c8] sm:$0xff]
      %v1148 = vld [vmem:[%s3 + $0x1d0] sm:$0xff]
      %v1149 = vld [vmem:[%s3 + $0x1d8] sm:$0xff]
      %v1150 = vld [vmem:[%s3 + $0x1e0] sm:$0xff]
      %v1151 = vld [vmem:[%s3 + $0x1e8] sm:$0xff]
      %v1152 = vld [vmem:[%s3 + $0x1f0] sm:$0xff]
      %v1153 = vld [vmem:[%s3 + $0x1f8] sm:$0xff]
      %v1154 = vld [vmem:[%s4] sm:$0x1]
      %v1156 = vlaneseq
      %v1157 = vshrl.u32 %v1156, 7
      %v1158 = vsub.s32 0, %v1157
      %v1159 = vrot.slane %v1154, %v1158
      %1161 = vmatprep.subr.mxu0 0.0
      %1162 = vmatpush1.msra.mxu0 %v1090
      %1163 = vmatprep.subr.mxu0 0.0
      %1164 = vmatpush1.msra.mxu0 %v1091
      %1165 = vmatprep.subr.mxu0 0.0
      %1166 = vmatpush1.msra.mxu0 %v1092
      %1167 = vmatprep.subr.mxu0 0.0
      %1168 = vmatpush1.msra.mxu0 %v1093
      %1169 = vmatprep.subr.mxu0 0.0
      %1170 = vmatpush1.msra.mxu0 %v1094
      %1171 = vmatprep.subr.mxu0 0.0
      %1172 = vmatpush1.msra.mxu0 %v1095
      %1173 = vmatprep.subr.mxu0 0.0
      %1174 = vmatpush1.msra.mxu0 %v1096
      %1175 = vmatprep.subr.mxu0 0.0
      %1176 = vmatpush1.msra.mxu0 %v1097
      %1177 = vmatprep.subr.mxu0 0.0
      %1178 = vmatpush1.msra.mxu0 %v1098
      %1179 = vmatprep.subr.mxu0 0.0
      %1180 = vmatpush1.msra.mxu0 %v1099
      %1181 = vmatprep.subr.mxu0 0.0
      %1182 = vmatpush1.msra.mxu0 %v1100
      %1183 = vmatprep.subr.mxu0 0.0
      %1184 = vmatpush1.msra.mxu0 %v1101
      %1185 = vmatprep.subr.mxu0 0.0
      %1186 = vmatpush1.msra.mxu0 %v1102
      %1187 = vmatprep.subr.mxu0 0.0
      %1188 = vmatpush1.msra.mxu0 %v1103
      %1189 = vmatprep.subr.mxu0 0.0
      %1190 = vmatpush1.msra.mxu0 %v1104
      %1191 = vmatprep.subr.mxu0 0.0
      %1192 = vmatpush1.msra.mxu0 %v1105
      %1193 = vmatprep.subr.mxu0 0.0
      %1194 = vmatpush1.msra.mxu0 %v1106
      %1195 = vmatprep.subr.mxu0 0.0
      %1196 = vmatpush1.msra.mxu0 %v1107
      %1197 = vmatprep.subr.mxu0 0.0
      %1198 = vmatpush1.msra.mxu0 %v1108
      %1199 = vmatprep.subr.mxu0 0.0
      %1200 = vmatpush1.msra.mxu0 %v1109
      %1201 = vmatprep.subr.mxu0 0.0
      %1202 = vmatpush1.msra.mxu0 %v1110
      %1203 = vmatprep.subr.mxu0 0.0
      %1204 = vmatpush1.msra.mxu0 %v1111
      %1205 = vmatprep.subr.mxu0 0.0
      %1206 = vmatpush1.msra.mxu0 %v1112
      %1207 = vmatprep.subr.mxu0 0.0
      %1208 = vmatpush1.msra.mxu0 %v1113
      %1209 = vmatprep.subr.mxu0 0.0
      %1210 = vmatpush1.msra.mxu0 %v1114
      %1211 = vmatprep.subr.mxu0 0.0
      %1212 = vmatpush1.msra.mxu0 %v1115
      %1213 = vmatprep.subr.mxu0 0.0
      %1214 = vmatpush1.msra.mxu0 %v1116
      %1215 = vmatprep.subr.mxu0 0.0
      %1216 = vmatpush1.msra.mxu0 %v1117
      %1217 = vmatprep.subr.mxu0 0.0
      %1218 = vmatpush1.msra.mxu0 %v1118
      %1219 = vmatprep.subr.mxu0 0.0
      %1220 = vmatpush1.msra.mxu0 %v1119
      %1221 = vmatprep.subr.mxu0 0.0
      %1222 = vmatpush1.msra.mxu0 %v1120
      %1223 = vmatprep.subr.mxu0 0.0
      %1224 = vmatpush1.msra.mxu0 %v1121
      %1225 = vmatprep.mubr.f32.mxu0 %v963
      %1226 = vmatmul.mubr.f32.gmra.mrb[0].mxu0 %v962
      %v1227 = vpop.f32.mrb[0].mxu0
      %v1228 = vadd.f32 %v1159, %v1227
      %v1229 = vpop.f32.mrb[0].mxu0
      %1230 = vmatprep.mubr.f32.mxu0 %v967
      %1231 = vmatmul.mubr.f32.gmra.mrb[0].mxu0 %v966
      %v1232 = vpop.f32.mrb[0].mxu0
      %v1233 = vadd.f32 %v1159, %v1232
      %v1234 = vpop.f32.mrb[0].mxu0
      %1235 = vmatprep.mubr.f32.mxu0 %v971
      %1236 = vmatmul.mubr.f32.gmra.mrb[0].mxu0 %v970
      %v1237 = vpop.f32.mrb[0].mxu0
      %v1238 = vadd.f32 %v1159, %v1237
      %v1239 = vpop.f32.mrb[0].mxu0
      %1240 = vmatprep.mubr.f32.mxu0 %v975
      %1241 = vmatmul.mubr.f32.gmra.mrb[0].mxu0 %v974
      %v1242 = vpop.f32.mrb[0].mxu0
      %v1243 = vadd.f32 %v1159, %v1242
      %v1244 = vpop.f32.mrb[0].mxu0
      %1245 = vmatprep.mubr.f32.mxu0 %v979
      %1246 = vmatmul.mubr.f32.gmra.mrb[0].mxu0 %v978
      %v1247 = vpop.f32.mrb[0].mxu0
      %v1248 = vadd.f32 %v1159, %v1247
      %v1249 = vpop.f32.mrb[0].mxu0
      %1250 = vmatprep.mubr.f32.mxu0 %v983
      %1251 = vmatmul.mubr.f32.gmra.mrb[0].mxu0 %v982
      %v1252 = vpop.f32.mrb[0].mxu0
      %v1253 = vadd.f32 %v1159, %v1252
      %v1254 = vpop.f32.mrb[0].mxu0
      %1255 = vmatprep.mubr.f32.mxu0 %v987
      %1256 = vmatmul.mubr.f32.gmra.mrb[0].mxu0 %v986
      %v1257 = vpop.f32.mrb[0].mxu0
      %v1258 = vadd.f32 %v1159, %v1257
      %v1259 = vpop.f32.mrb[0].mxu0
      %1260 = vmatprep.mubr.f32.mxu0 %v991
      %1261 = vmatmul.mubr.f32.gmra.mrb[0].mxu0 %v990
      %v1262 = vpop.f32.mrb[0].mxu0
      %v1263 = vadd.f32 %v1159, %v1262
      %v1264 = vpop.f32.mrb[0].mxu0
      %1265 = vmatprep.mubr.f32.mxu0 %v995
      %1266 = vmatmul.mubr.f32.gmra.mrb[0].mxu0 %v994
      %v1267 = vpop.f32.mrb[0].mxu0
      %v1268 = vadd.f32 %v1159, %v1267
      %v1269 = vpop.f32.mrb[0].mxu0
      %1270 = vmatprep.mubr.f32.mxu0 %v999
      %1271 = vmatmul.mubr.f32.gmra.mrb[0].mxu0 %v998
      %v1272 = vpop.f32.mrb[0].mxu0
      %v1273 = vadd.f32 %v1159, %v1272
      %v1274 = vpop.f32.mrb[0].mxu0
      %1275 = vmatprep.mubr.f32.mxu0 %v1003
      %1276 = vmatmul.mubr.f32.gmra.mrb[0].mxu0 %v1002
      %v1277 = vpop.f32.mrb[0].mxu0
      %v1278 = vadd.f32 %v1159, %v1277
      %v1279 = vpop.f32.mrb[0].mxu0
      %1280 = vmatprep.mubr.f32.mxu0 %v1007
      %1281 = vmatmul.mubr.f32.gmra.mrb[0].mxu0 %v1006
      %v1282 = vpop.f32.mrb[0].mxu0
      %v1283 = vadd.f32 %v1159, %v1282
      %v1284 = vpop.f32.mrb[0].mxu0
      %1285 = vmatprep.mubr.f32.mxu0 %v1011
      %1286 = vmatmul.mubr.f32.gmra.mrb[0].mxu0 %v1010
      %v1287 = vpop.f32.mrb[0].mxu0
      %v1288 = vadd.f32 %v1159, %v1287
      %v1289 = vpop.f32.mrb[0].mxu0
      %1290 = vmatprep.mubr.f32.mxu0 %v1015
      %1291 = vmatmul.mubr.f32.gmra.mrb[0].mxu0 %v1014
      %v1292 = vpop.f32.mrb[0].mxu0
      %v1293 = vadd.f32 %v1159, %v1292
      %v1294 = vpop.f32.mrb[0].mxu0
      %1295 = vmatprep.mubr.f32.mxu0 %v1019
      %1296 = vmatmul.mubr.f32.gmra.mrb[0].mxu0 %v1018
      %v1297 = vpop.f32.mrb[0].mxu0
      %v1298 = vadd.f32 %v1159, %v1297
      %v1299 = vpop.f32.mrb[0].mxu0
      %1300 = vmatprep.mubr.f32.mxu0 %v1023
      %1301 = vmatmul.mubr.f32.gmra.mrb[0].mxu0 %v1022
      %v1302 = vpop.f32.mrb[0].mxu0
      %v1303 = vadd.f32 %v1159, %v1302
      %v1304 = vpop.f32.mrb[0].mxu0
      %1305 = vmatprep.mubr.f32.mxu0 %v1027
      %1306 = vmatmul.mubr.f32.gmra.mrb[0].mxu0 %v1026
      %v1307 = vpop.f32.mrb[0].mxu0
      %v1308 = vadd.f32 %v1159, %v1307
      %v1309 = vpop.f32.mrb[0].mxu0
      %1310 = vmatprep.mubr.f32.mxu0 %v1031
      %1311 = vmatmul.mubr.f32.gmra.mrb[0].mxu0 %v1030
      %v1312 = vpop.f32.mrb[0].mxu0
      %v1313 = vadd.f32 %v1159, %v1312
      %v1314 = vpop.f32.mrb[0].mxu0
      %1315 = vmatprep.mubr.f32.mxu0 %v1035
      %1316 = vmatmul.mubr.f32.gmra.mrb[0].mxu0 %v1034
      %v1317 = vpop.f32.mrb[0].mxu0
      %v1318 = vadd.f32 %v1159, %v1317
      %v1319 = vpop.f32.mrb[0].mxu0
      %1320 = vmatprep.mubr.f32.mxu0 %v1039
      %1321 = vmatmul.mubr.f32.gmra.mrb[0].mxu0 %v1038
      %v1322 = vpop.f32.mrb[0].mxu0
      %v1323 = vadd.f32 %v1159, %v1322
      %v1324 = vpop.f32.mrb[0].mxu0
      %1325 = vmatprep.mubr.f32.mxu0 %v1043
      %1326 = vmatmul.mubr.f32.gmra.mrb[0].mxu0 %v1042
      %v1327 = vpop.f32.mrb[0].mxu0
      %v1328 = vadd.f32 %v1159, %v1327
      %v1329 = vpop.f32.mrb[0].mxu0
      %1330 = vmatprep.mubr.f32.mxu0 %v1047
      %1331 = vmatmul.mubr.f32.gmra.mrb[0].mxu0 %v1046
      %v1332 = vpop.f32.mrb[0].mxu0
      %v1333 = vadd.f32 %v1159, %v1332
      %v1334 = vpop.f32.mrb[0].mxu0
      %1335 = vmatprep.mubr.f32.mxu0 %v1051
      %1336 = vmatmul.mubr.f32.gmra.mrb[0].mxu0 %v1050
      %v1337 = vpop.f32.mrb[0].mxu0
      %v1338 = vadd.f32 %v1159, %v1337
      %v1339 = vpop.f32.mrb[0].mxu0
      %1340 = vmatprep.mubr.f32.mxu0 %v1055
      %1341 = vmatmul.mubr.f32.gmra.mrb[0].mxu0 %v1054
      %v1342 = vpop.f32.mrb[0].mxu0
      %v1343 = vadd.f32 %v1159, %v1342
      %v1344 = vpop.f32.mrb[0].mxu0
      %1345 = vmatprep.mubr.f32.mxu0 %v1059
      %1346 = vmatmul.mubr.f32.gmra.mrb[0].mxu0 %v1058
      %v1347 = vpop.f32.mrb[0].mxu0
      %v1348 = vadd.f32 %v1159, %v1347
      %v1349 = vpop.f32.mrb[0].mxu0
      %1350 = vmatprep.mubr.f32.mxu0 %v1063
      %1351 = vmatmul.mubr.f32.gmra.mrb[0].mxu0 %v1062
      %v1352 = vpop.f32.mrb[0].mxu0
      %v1353 = vadd.f32 %v1159, %v1352
      %v1354 = vpop.f32.mrb[0].mxu0
      %1355 = vmatprep.mubr.f32.mxu0 %v1067
      %1356 = vmatmul.mubr.f32.gmra.mrb[0].mxu0 %v1066
      %v1357 = vpop.f32.mrb[0].mxu0
      %v1358 = vadd.f32 %v1159, %v1357
      %v1359 = vpop.f32.mrb[0].mxu0
      %1360 = vmatprep.mubr.f32.mxu0 %v1071
      %1361 = vmatmul.mubr.f32.gmra.mrb[0].mxu0 %v1070
      %v1362 = vpop.f32.mrb[0].mxu0
      %v1363 = vadd.f32 %v1159, %v1362
      %v1364 = vpop.f32.mrb[0].mxu0
      %1365 = vmatprep.mubr.f32.mxu0 %v1075
      %1366 = vmatmul.mubr.f32.gmra.mrb[0].mxu0 %v1074
      %v1367 = vpop.f32.mrb[0].mxu0
      %v1368 = vadd.f32 %v1159, %v1367
      %v1369 = vpop.f32.mrb[0].mxu0
      %1370 = vmatprep.mubr.f32.mxu0 %v1079
      %1371 = vmatmul.mubr.f32.gmra.mrb[0].mxu0 %v1078
      %v1372 = vpop.f32.mrb[0].mxu0
      %v1373 = vadd.f32 %v1159, %v1372
      %v1374 = vpop.f32.mrb[0].mxu0
      %1375 = vmatprep.mubr.f32.mxu0 %v1083
      %1376 = vmatmul.mubr.f32.gmra.mrb[0].mxu0 %v1082
      %v1377 = vpop.f32.mrb[0].mxu0
      %v1378 = vadd.f32 %v1159, %v1377
      %v1379 = vpop.f32.mrb[0].mxu0
      %1380 = vmatprep.mubr.f32.mxu0 %v1087
      %1381 = vmatmul.mubr.f32.gmra.mrb[0].mxu0 %v1086
      %v1382 = vpop.f32.mrb[0].mxu0
      %v1383 = vadd.f32 %v1159, %v1382
      %v1384 = vpop.f32.mrb[0].mxu0
      %1385 = vdwg.mxu0
      %1386 = vmatprep.subr.mxu0 0.0
      %1387 = vmatpush1.msra.mxu0 %v1122
      %1388 = vmatprep.subr.mxu0 0.0
      %1389 = vmatpush1.msra.mxu0 %v1123
      %1390 = vmatprep.subr.mxu0 0.0
      %1391 = vmatpush1.msra.mxu0 %v1124
      %1392 = vmatprep.subr.mxu0 0.0
      %1393 = vmatpush1.msra.mxu0 %v1125
      %1394 = vmatprep.subr.mxu0 0.0
      %1395 = vmatpush1.msra.mxu0 %v1126
      %1396 = vmatprep.subr.mxu0 0.0
      %1397 = vmatpush1.msra.mxu0 %v1127
      %1398 = vmatprep.subr.mxu0 0.0
      %1399 = vmatpush1.msra.mxu0 %v1128
      %1400 = vmatprep.subr.mxu0 0.0
      %1401 = vmatpush1.msra.mxu0 %v1129
      %1402 = vmatprep.subr.mxu0 0.0
      %1403 = vmatpush1.msra.mxu0 %v1130
      %1404 = vmatprep.subr.mxu0 0.0
      %1405 = vmatpush1.msra.mxu0 %v1131
      %1406 = vmatprep.subr.mxu0 0.0
      %1407 = vmatpush1.msra.mxu0 %v1132
      %1408 = vmatprep.subr.mxu0 0.0
      %1409 = vmatpush1.msra.mxu0 %v1133
      %1410 = vmatprep.subr.mxu0 0.0
      %1411 = vmatpush1.msra.mxu0 %v1134
      %1412 = vmatprep.subr.mxu0 0.0
      %1413 = vmatpush1.msra.mxu0 %v1135
      %1414 = vmatprep.subr.mxu0 0.0
      %1415 = vmatpush1.msra.mxu0 %v1136
      %1416 = vmatprep.subr.mxu0 0.0
      %1417 = vmatpush1.msra.mxu0 %v1137
      %1418 = vmatprep.subr.mxu0 0.0
      %1419 = vmatpush1.msra.mxu0 %v1138
      %1420 = vmatprep.subr.mxu0 0.0
      %1421 = vmatpush1.msra.mxu0 %v1139
      %1422 = vmatprep.subr.mxu0 0.0
      %1423 = vmatpush1.msra.mxu0 %v1140
      %1424 = vmatprep.subr.mxu0 0.0
      %1425 = vmatpush1.msra.mxu0 %v1141
      %1426 = vmatprep.subr.mxu0 0.0
      %1427 = vmatpush1.msra.mxu0 %v1142
      %1428 = vmatprep.subr.mxu0 0.0
      %1429 = vmatpush1.msra.mxu0 %v1143
      %1430 = vmatprep.subr.mxu0 0.0
      %1431 = vmatpush1.msra.mxu0 %v1144
      %1432 = vmatprep.subr.mxu0 0.0
      %1433 = vmatpush1.msra.mxu0 %v1145
      %1434 = vmatprep.subr.mxu0 0.0
      %1435 = vmatpush1.msra.mxu0 %v1146
      %1436 = vmatprep.subr.mxu0 0.0
      %1437 = vmatpush1.msra.mxu0 %v1147
      %1438 = vmatprep.subr.mxu0 0.0
      %1439 = vmatpush1.msra.mxu0 %v1148
      %1440 = vmatprep.subr.mxu0 0.0
      %1441 = vmatpush1.msra.mxu0 %v1149
      %1442 = vmatprep.subr.mxu0 0.0
      %1443 = vmatpush1.msra.mxu0 %v1150
      %1444 = vmatprep.subr.mxu0 0.0
      %1445 = vmatpush1.msra.mxu0 %v1151
      %1446 = vmatprep.subr.mxu0 0.0
      %1447 = vmatpush1.msra.mxu0 %v1152
      %1448 = vmatprep.subr.mxu0 0.0
      %1449 = vmatpush1.msra.mxu0 %v1153
      %1450 = vmatprep.mubr.f32.mxu0 %v965
      %1451 = vmatmul.mubr.f32.gmra.mrb[0].mxu0 %v964
      %v1452 = vpop.f32.mrb[0].mxu0
      %v1453 = vadd.f32 %v1228, %v1452
      %v1454 = vpop.f32.mrb[0].mxu0
      %1455 = vmatprep.mubr.f32.mxu0 %v969
      %1456 = vmatmul.mubr.f32.gmra.mrb[0].mxu0 %v968
      %v1457 = vpop.f32.mrb[0].mxu0
      %v1458 = vadd.f32 %v1233, %v1457
      %v1459 = vpop.f32.mrb[0].mxu0
      %1460 = vmatprep.mubr.f32.mxu0 %v973
      %1461 = vmatmul.mubr.f32.gmra.mrb[0].mxu0 %v972
      %v1462 = vpop.f32.mrb[0].mxu0
      %v1463 = vadd.f32 %v1238, %v1462
      %v1464 = vpop.f32.mrb[0].mxu0
      %1465 = vmatprep.mubr.f32.mxu0 %v977
      %1466 = vmatmul.mubr.f32.gmra.mrb[0].mxu0 %v976
      %v1467 = vpop.f32.mrb[0].mxu0
      %v1468 = vadd.f32 %v1243, %v1467
      %v1469 = vpop.f32.mrb[0].mxu0
      %1470 = vmatprep.mubr.f32.mxu0 %v981
      %1471 = vmatmul.mubr.f32.gmra.mrb[0].mxu0 %v980
      %v1472 = vpop.f32.mrb[0].mxu0
      %v1473 = vadd.f32 %v1248, %v1472
      %v1474 = vpop.f32.mrb[0].mxu0
      %1475 = vmatprep.mubr.f32.mxu0 %v985
      %1476 = vmatmul.mubr.f32.gmra.mrb[0].mxu0 %v984
      %v1477 = vpop.f32.mrb[0].mxu0
      %v1478 = vadd.f32 %v1253, %v1477
      %v1479 = vpop.f32.mrb[0].mxu0
      %1480 = vmatprep.mubr.f32.mxu0 %v989
      %1481 = vmatmul.mubr.f32.gmra.mrb[0].mxu0 %v988
      %v1482 = vpop.f32.mrb[0].mxu0
      %v1483 = vadd.f32 %v1258, %v1482
      %v1484 = vpop.f32.mrb[0].mxu0
      %1485 = vmatprep.mubr.f32.mxu0 %v993
      %1486 = vmatmul.mubr.f32.gmra.mrb[0].mxu0 %v992
      %v1487 = vpop.f32.mrb[0].mxu0
      %v1488 = vadd.f32 %v1263, %v1487
      %v1489 = vpop.f32.mrb[0].mxu0
      %1490 = vmatprep.mubr.f32.mxu0 %v997
      %1491 = vmatmul.mubr.f32.gmra.mrb[0].mxu0 %v996
      %v1492 = vpop.f32.mrb[0].mxu0
      %v1493 = vadd.f32 %v1268, %v1492
      %v1494 = vpop.f32.mrb[0].mxu0
      %1495 = vmatprep.mubr.f32.mxu0 %v1001
      %1496 = vmatmul.mubr.f32.gmra.mrb[0].mxu0 %v1000
      %v1497 = vpop.f32.mrb[0].mxu0
      %v1498 = vadd.f32 %v1273, %v1497
      %v1499 = vpop.f32.mrb[0].mxu0
      %1500 = vmatprep.mubr.f32.mxu0 %v1005
      %1501 = vmatmul.mubr.f32.gmra.mrb[0].mxu0 %v1004
      %v1502 = vpop.f32.mrb[0].mxu0
      %v1503 = vadd.f32 %v1278, %v1502
      %v1504 = vpop.f32.mrb[0].mxu0
      %1505 = vmatprep.mubr.f32.mxu0 %v1009
      %1506 = vmatmul.mubr.f32.gmra.mrb[0].mxu0 %v1008
      %v1507 = vpop.f32.mrb[0].mxu0
      %v1508 = vadd.f32 %v1283, %v1507
      %v1509 = vpop.f32.mrb[0].mxu0
      %1510 = vmatprep.mubr.f32.mxu0 %v1013
      %1511 = vmatmul.mubr.f32.gmra.mrb[0].mxu0 %v1012
      %v1512 = vpop.f32.mrb[0].mxu0
      %v1513 = vadd.f32 %v1288, %v1512
      %v1514 = vpop.f32.mrb[0].mxu0
      %1515 = vmatprep.mubr.f32.mxu0 %v1017
      %1516 = vmatmul.mubr.f32.gmra.mrb[0].mxu0 %v1016
      %v1517 = vpop.f32.mrb[0].mxu0
      %v1518 = vadd.f32 %v1293, %v1517
      %v1519 = vpop.f32.mrb[0].mxu0
      %1520 = vmatprep.mubr.f32.mxu0 %v1021
      %1521 = vmatmul.mubr.f32.gmra.mrb[0].mxu0 %v1020
      %v1522 = vpop.f32.mrb[0].mxu0
      %v1523 = vadd.f32 %v1298, %v1522
      %v1524 = vpop.f32.mrb[0].mxu0
      %1525 = vmatprep.mubr.f32.mxu0 %v1025
      %1526 = vmatmul.mubr.f32.gmra.mrb[0].mxu0 %v1024
      %v1527 = vpop.f32.mrb[0].mxu0
      %v1528 = vadd.f32 %v1303, %v1527
      %v1529 = vpop.f32.mrb[0].mxu0
      %1530 = vmatprep.mubr.f32.mxu0 %v1029
      %1531 = vmatmul.mubr.f32.gmra.mrb[0].mxu0 %v1028
      %v1532 = vpop.f32.mrb[0].mxu0
      %v1533 = vadd.f32 %v1308, %v1532
      %v1534 = vpop.f32.mrb[0].mxu0
      %1535 = vmatprep.mubr.f32.mxu0 %v1033
      %1536 = vmatmul.mubr.f32.gmra.mrb[0].mxu0 %v1032
      %v1537 = vpop.f32.mrb[0].mxu0
      %v1538 = vadd.f32 %v1313, %v1537
      %v1539 = vpop.f32.mrb[0].mxu0
      %1540 = vmatprep.mubr.f32.mxu0 %v1037
      %1541 = vmatmul.mubr.f32.gmra.mrb[0].mxu0 %v1036
      %v1542 = vpop.f32.mrb[0].mxu0
      %v1543 = vadd.f32 %v1318, %v1542
      %v1544 = vpop.f32.mrb[0].mxu0
      %1545 = vmatprep.mubr.f32.mxu0 %v1041
      %1546 = vmatmul.mubr.f32.gmra.mrb[0].mxu0 %v1040
      %v1547 = vpop.f32.mrb[0].mxu0
      %v1548 = vadd.f32 %v1323, %v1547
      %v1549 = vpop.f32.mrb[0].mxu0
      %1550 = vmatprep.mubr.f32.mxu0 %v1045
      %1551 = vmatmul.mubr.f32.gmra.mrb[0].mxu0 %v1044
      %v1552 = vpop.f32.mrb[0].mxu0
      %v1553 = vadd.f32 %v1328, %v1552
      %v1554 = vpop.f32.mrb[0].mxu0
      %1555 = vmatprep.mubr.f32.mxu0 %v1049
      %1556 = vmatmul.mubr.f32.gmra.mrb[0].mxu0 %v1048
      %v1557 = vpop.f32.mrb[0].mxu0
      %v1558 = vadd.f32 %v1333, %v1557
      %v1559 = vpop.f32.mrb[0].mxu0
      %1560 = vmatprep.mubr.f32.mxu0 %v1053
      %1561 = vmatmul.mubr.f32.gmra.mrb[0].mxu0 %v1052
      %v1562 = vpop.f32.mrb[0].mxu0
      %v1563 = vadd.f32 %v1338, %v1562
      %v1564 = vpop.f32.mrb[0].mxu0
      %1565 = vmatprep.mubr.f32.mxu0 %v1057
      %1566 = vmatmul.mubr.f32.gmra.mrb[0].mxu0 %v1056
      %v1567 = vpop.f32.mrb[0].mxu0
      %v1568 = vadd.f32 %v1343, %v1567
      %v1569 = vpop.f32.mrb[0].mxu0
      %1570 = vmatprep.mubr.f32.mxu0 %v1061
      %1571 = vmatmul.mubr.f32.gmra.mrb[0].mxu0 %v1060
      %v1572 = vpop.f32.mrb[0].mxu0
      %v1573 = vadd.f32 %v1348, %v1572
      %v1574 = vpop.f32.mrb[0].mxu0
      %1575 = vmatprep.mubr.f32.mxu0 %v1065
      %1576 = vmatmul.mubr.f32.gmra.mrb[0].mxu0 %v1064
      %v1577 = vpop.f32.mrb[0].mxu0
      %v1578 = vadd.f32 %v1353, %v1577
      %v1579 = vpop.f32.mrb[0].mxu0
      %1580 = vmatprep.mubr.f32.mxu0 %v1069
      %1581 = vmatmul.mubr.f32.gmra.mrb[0].mxu0 %v1068
      %v1582 = vpop.f32.mrb[0].mxu0
      %v1583 = vadd.f32 %v1358, %v1582
      %v1584 = vpop.f32.mrb[0].mxu0
      %1585 = vmatprep.mubr.f32.mxu0 %v1073
      %1586 = vmatmul.mubr.f32.gmra.mrb[0].mxu0 %v1072
      %v1587 = vpop.f32.mrb[0].mxu0
      %v1588 = vadd.f32 %v1363, %v1587
      %v1589 = vpop.f32.mrb[0].mxu0
      %1590 = vmatprep.mubr.f32.mxu0 %v1077
      %1591 = vmatmul.mubr.f32.gmra.mrb[0].mxu0 %v1076
      %v1592 = vpop.f32.mrb[0].mxu0
      %v1593 = vadd.f32 %v1368, %v1592
      %v1594 = vpop.f32.mrb[0].mxu0
      %1595 = vmatprep.mubr.f32.mxu0 %v1081
      %1596 = vmatmul.mubr.f32.gmra.mrb[0].mxu0 %v1080
      %v1597 = vpop.f32.mrb[0].mxu0
      %v1598 = vadd.f32 %v1373, %v1597
      %v1599 = vpop.f32.mrb[0].mxu0
      %1600 = vmatprep.mubr.f32.mxu0 %v1085
      %1601 = vmatmul.mubr.f32.gmra.mrb[0].mxu0 %v1084
      %v1602 = vpop.f32.mrb[0].mxu0
      %v1603 = vadd.f32 %v1378, %v1602
      %v1604 = vpop.f32.mrb[0].mxu0
      %1605 = vmatprep.mubr.f32.mxu0 %v1089
      %1606 = vmatmul.mubr.f32.gmra.mrb[0].mxu0 %v1088
      %v1607 = vpop.f32.mrb[0].mxu0
      %v1608 = vadd.f32 %v1383, %v1607
      %v1609 = vpop.f32.mrb[0].mxu0
      %1610 = vdwg.mxu0
      %1611 = vst [vmem:[%s262] sm:$0xff] %v1453
      %1612 = vst [vmem:[%s262 + $0x8] sm:$0xff] %v1458
      %1613 = vst [vmem:[%s262 + $0x10] sm:$0xff] %v1463
      %1614 = vst [vmem:[%s262 + $0x18] sm:$0xff] %v1468
      %1615 = vst [vmem:[%s262 + $0x20] sm:$0xff] %v1473
      %1616 = vst [vmem:[%s262 + $0x28] sm:$0xff] %v1478
      %1617 = vst [vmem:[%s262 + $0x30] sm:$0xff] %v1483
      %1618 = vst [vmem:[%s262 + $0x38] sm:$0xff] %v1488
      %1619 = vst [vmem:[%s262 + $0x40] sm:$0xff] %v1493
      %1620 = vst [vmem:[%s262 + $0x48] sm:$0xff] %v1498
      %1621 = vst [vmem:[%s262 + $0x50] sm:$0xff] %v1503
      %1622 = vst [vmem:[%s262 + $0x58] sm:$0xff] %v1508
      %1623 = vst [vmem:[%s262 + $0x60] sm:$0xff] %v1513
      %1624 = vst [vmem:[%s262 + $0x68] sm:$0xff] %v1518
      %1625 = vst [vmem:[%s262 + $0x70] sm:$0xff] %v1523
      %1626 = vst [vmem:[%s262 + $0x78] sm:$0xff] %v1528
      %1627 = vst [vmem:[%s262 + $0x80] sm:$0xff] %v1533
      %1628 = vst [vmem:[%s262 + $0x88] sm:$0xff] %v1538
      %1629 = vst [vmem:[%s262 + $0x90] sm:$0xff] %v1543
      %1630 = vst [vmem:[%s262 + $0x98] sm:$0xff] %v1548
      %1631 = vst [vmem:[%s262 + $0xa0] sm:$0xff] %v1553
      %1632 = vst [vmem:[%s262 + $0xa8] sm:$0xff] %v1558
      %1633 = vst [vmem:[%s262 + $0xb0] sm:$0xff] %v1563
      %1634 = vst [vmem:[%s262 + $0xb8] sm:$0xff] %v1568
      %1635 = vst [vmem:[%s262 + $0xc0] sm:$0xff] %v1573
      %1636 = vst [vmem:[%s262 + $0xc8] sm:$0xff] %v1578
      %1637 = vst [vmem:[%s262 + $0xd0] sm:$0xff] %v1583
      %1638 = vst [vmem:[%s262 + $0xd8] sm:$0xff] %v1588
      %1639 = vst [vmem:[%s262 + $0xe0] sm:$0xff] %v1593
      %1640 = vst [vmem:[%s262 + $0xe8] sm:$0xff] %v1598
      %1641 = vst [vmem:[%s262 + $0xf0] sm:$0xff] %v1603
      %1642 = vst [vmem:[%s262 + $0xf8] sm:$0xff] %v1608
      %s1643 = smul.u32 32, %s21
      %p1644 = scmp.lt.s32.totalorder %s20, 1
      %s1645 = scalar_select %p1644, %s20, 1
      %p1646 = scmp.lt.s32.totalorder %s1643, 31
      %s1647 = scalar_select %p1646, %s1643, 31
      %s1648 = smul.addr %s1645, 32
      %s1649 = sadd.s32 %s1647, %s1648
      %s1650 = smul.addr %s1649, 8
      %s1651 = scalar_lea.vmem %s5, %s1650
      // Predicated region
      $region41: #{rpn_forward.1} parent=39 // pred_check
        %p1652 = pneg %p160
      $region42: #{rpn_forward.1} parent=39 // pred_check_branch
        %1654 = sbr.rel (%p1652) target = $region44
      $region43: #{rpn_forward.1} parent=39 // pred_region
        %s1655 = smul.u32 32, %s21
      $region44: #{rpn_forward.1} parent=39 // pred_fallthru
        _
    $region40: #{rpn_forward.1} parent=5 // pred_fallthru
      _
    %p1656 = scmp.le.s32.totalorder 2, %s11
    // Predicated region
    $region45: #{rpn_forward.1} parent=5 // pred_check
      %p1657 = pneg %p1656
    $region46: #{rpn_forward.1} parent=5 // pred_check_branch
      %1659 = sbr.rel (%p1657) target = $region48
    $region47: #{rpn_forward.1} parent=5 // pred_region
      %s1660 = ssub.s32 %s11, 2
      // Predicated region
      $region49: #{rpn_forward.1} parent=47 // pred_check
        %p1661 = pneg %p166
      $region50: #{rpn_forward.1} parent=47 // pred_check_branch
        %1663 = sbr.rel (%p1661) target = $region52
      $region51: #{rpn_forward.1} parent=47 // pred_region
        %s1664 = smul.u32 32, %s23
        %p1665 = scmp.lt.s32.totalorder %s22, 1
        %s1666 = scalar_select %p1665, %s22, 1
        %p1667 = scmp.lt.s32.totalorder %s1664, 31
        %s1668 = scalar_select %p1667, %s1664, 31
        %s1669 = smul.addr %s1666, 32
        %s1670 = sadd.s32 %s1668, %s1669
        %s1671 = smul.addr %s1670, 8
        %s1672 = scalar_lea.vmem %s5, %s1671
      $region52: #{rpn_forward.1} parent=47 // pred_fallthru
        _
    $region48: #{rpn_forward.1} parent=5 // pred_fallthru
      _
  $region6: #{rpn_forward.1} parent=0 // loop_footer
    %s15 = sadd.s32 1, %s11
  $region7: #{rpn_forward.1} parent=0 // loop_footer_branch
    %10 = sbr.rel target = $region3
  $region8: #{rpn_forward.1} parent=0 // loop_exit
    _

</llo_original>
